<compile_context>
chip_gen: v6e
topology: v6e:2x2x1
jax: 0.10.0
libtpu: 0.0.40
codegen_flags: <defaults>
</compile_context>

<pallas_src>
import jax
import jax.numpy as jnp
from jax import lax
from jax.experimental import pallas as pl
from jax.experimental.pallas import tpu as pltpu

NEG_SLOPE = 0.2
BN_EPS = 1e-5
ROW_CHUNK = 64          # conv2 accumulator chunk (rows of the (LO,128) output)
NB_MAX = 8              # images per conv grid step
STAT_ROWS = 8           # stats blocks padded to 8 sublanes (only row 0 is used)


def _round_up(x, m):
    return ((x + m - 1) // m) * m


# --------------- kernel 1: conv1 + LeakyReLU + conv2 (+bias) + BN batch stats ---------------

def _make_conv_kernel(NB, R, LO, Wq, W2, n_real, g_inner):
    def kernel(xq_ref, w1_ref, w2a_ref, w2b_ref, b2_ref, y_ref, s1_ref, s2_ref, y1_scr):
        # xq_ref : (NB, R, 4*(9C+1)) bf16   phase-ordered conv1 im2col (+indicator column)
        # w1_ref : (4*(9C+1), 256)    bf16   block-diagonal conv1 weight (bias folded in)
        # w2a_ref: (2, 256, 128)      bf16   conv2 tap groups at row offsets [0, Wq]   (K=256)
        # w2b_ref: (2, 128, 128)      bf16   conv2 tap groups at row offsets [1, Wq+1] (K=128)
        # b2_ref : (1, 128)           f32
        # y_ref  : (NB, LO, 128)      bf16   conv2 output (bias added)
        # s1/s2  : (STAT_ROWS, 128)   f32    per-core BN sum / sumsq accumulators (row 0 used)
        # y1_scr : (R, 256)           bf16   conv1 output, phase-plane layout, one image
        o = pl.program_id(0)
        i = pl.program_id(1)

        @pl.when(i == 0)
        def _():
            s1_ref[...] = jnp.zeros_like(s1_ref)
            s2_ref[...] = jnp.zeros_like(s2_ref)

        bias = b2_ref[...]                              # (1, 128) f32
        wg0 = w2a_ref[0]                                # off = 0,    K = 256
        wg2 = w2a_ref[1]                                # off = Wq,   K = 256
        wg1 = w2b_ref[0]                                # off = 1,    K = 128
        wg3 = w2b_ref[1]                                # off = Wq+1, K = 128

        base = (o * g_inner + i) * NB                   # first global image in this block

        for li in range(NB):
            # ---- conv1 (bias folded via indicator column) + LeakyReLU, phase-plane layout
            z = jnp.dot(xq_ref[li], w1_ref[...], preferred_element_type=jnp.float32)  # (R,256)
            z = jnp.where(z > 0, z, NEG_SLOPE * z)
            y1_scr[...] = z.astype(y1_scr.dtype)

            # padded (junk) batch images are excluded from the BN statistics
            w_img = (base + li < n_real).astype(jnp.float32)

            s1 = jnp.zeros((1, 128), jnp.float32)
            s2 = jnp.zeros((1, 128), jnp.float32)
            for c0 in range(0, LO, ROW_CHUNK):
                rows = min(ROW_CHUNK, LO - c0)
                # 3x3 / stride-2 conv as 4 lane-packed MXU dots over contiguous plane rows
                acc = jnp.dot(y1_scr[c0:c0 + rows, :], wg0,
                              preferred_element_type=jnp.float32)
                acc += jnp.dot(y1_scr[c0 + 1:c0 + 1 + rows, 0:128], wg1,
                               preferred_element_type=jnp.float32)
                acc += jnp.dot(y1_scr[c0 + Wq:c0 + Wq + rows, :], wg2,
                               preferred_element_type=jnp.float32)
                acc += jnp.dot(y1_scr[c0 + Wq + 1:c0 + Wq + 1 + rows, 0:128], wg3,
                               preferred_element_type=jnp.float32)

                # BN batch stats on the pre-bias accumulator; junk phase column masked.
                rr = c0 + lax.broadcasted_iota(jnp.int32, (rows, 1), 0)
                valid = (rr % Wq) < W2
                m = jnp.where(valid, acc, 0.0)
                s1 += jnp.sum(m, axis=0, keepdims=True)
                s2 += jnp.sum(m * m, axis=0, keepdims=True)

                y_ref[li, c0:c0 + rows, :] = (acc + bias).astype(y_ref.dtype)

            s1_ref[0:1, :] += w_img * s1
            s2_ref[0:1, :] += w_img * s2

    return kernel


def conv_fused(xq, w1q, w2a, w2b, b2, *, NB, n_real, H2, W2, n_cores):
    Np, R, K4 = xq.shape
    Wq = W2 + 1
    LO = H2 * Wq
    steps = Np // NB
    g_inner = steps // n_cores
    kernel = _make_conv_kernel(NB, R, LO, Wq, W2, n_real, g_inner)
    return pl.pallas_call(
        kernel,
        out_shape=(
            jax.ShapeDtypeStruct((Np, LO, 128), jnp.bfloat16),
            jax.ShapeDtypeStruct((n_cores * STAT_ROWS, 128), jnp.float32),
            jax.ShapeDtypeStruct((n_cores * STAT_ROWS, 128), jnp.float32),
        ),
        grid=(n_cores, g_inner),
        in_specs=[
            pl.BlockSpec((NB, R, K4), lambda o, i: (o * g_inner + i, 0, 0)),
            pl.BlockSpec((K4, 256), lambda o, i: (0, 0)),
            pl.BlockSpec((2, 256, 128), lambda o, i: (0, 0, 0)),
            pl.BlockSpec((2, 128, 128), lambda o, i: (0, 0, 0)),
            pl.BlockSpec((1, 128), lambda o, i: (0, 0)),
        ],
        out_specs=(
            pl.BlockSpec((NB, LO, 128), lambda o, i: (o * g_inner + i, 0, 0)),
            pl.BlockSpec((STAT_ROWS, 128), lambda o, i: (o, 0)),
            pl.BlockSpec((STAT_ROWS, 128), lambda o, i: (o, 0)),
        ),
        scratch_shapes=[pltpu.VMEM((R, 256), jnp.bfloat16)],
        compiler_params=pltpu.CompilerParams(
            # outer axis parallel (v7x megacore), inner axis accumulates BN stats -> arbitrary
            dimension_semantics=("parallel", "arbitrary"),
            vmem_limit_bytes=32 * 1024 * 1024),
    )(xq, w1q, w2a, w2b, b2)


# ---------- kernel 2: BatchNorm(apply) + LeakyReLU + Linear(->1) + Sigmoid (fused) ----------

def _make_head_kernel(count):
    inv_cnt = 1.0 / float(count)

    def kernel(y_ref, s1_ref, s2_ref, b2_ref, g_ref, be_ref, w_ref, bfc_ref, o_ref):
        s1 = jnp.sum(s1_ref[...], axis=0, keepdims=True) * inv_cnt     # mean of pre-bias acc
        s2 = jnp.sum(s2_ref[...], axis=0, keepdims=True) * inv_cnt
        var = s2 - s1 * s1                                             # biased batch variance
        mean = s1 + b2_ref[...]
        scale = g_ref[...] * lax.rsqrt(var + BN_EPS)
        shift = be_ref[...] - mean * scale

        y = y_ref[...].astype(jnp.float32)                             # (g3, LO, 128)
        z = y * scale[None, :, :] + shift[None, :, :]
        a = jnp.where(z > 0, z, NEG_SLOPE * z)

        # Linear(feat -> 1) as VPU multiply + reduction; junk phase rows carry zero weights.
        prod = a * w_ref[...][None, :, :]
        s = jnp.sum(prod, axis=2)
        s = jnp.sum(s, axis=1, keepdims=True)                          # (g3, 1)
        logit = s + bfc_ref[...]
        e = jnp.exp(-jnp.abs(logit))                                   # stable sigmoid
        sig = 1.0 / (1.0 + e)
        o_ref[...] = jnp.where(logit >= 0, sig, 1.0 - sig)

    return kernel


def head(y2, s1, s2, b2, gamma, beta, wfc, bfc, g3, count):
    Np, LO, C = y2.shape
    NR = s1.shape[0]
    kernel = _make_head_kernel(count)
    return pl.pallas_call(
        kernel,
        out_shape=jax.ShapeDtypeStruct((Np, 1), jnp.float32),
        grid=(Np // g3,),
        in_specs=[
            pl.BlockSpec((g3, LO, C), lambda i: (i, 0, 0)),
            pl.BlockSpec((NR, C), lambda i: (0, 0)),
            pl.BlockSpec((NR, C), lambda i: (0, 0)),
            pl.BlockSpec((1, C), lambda i: (0, 0)),
            pl.BlockSpec((1, C), lambda i: (0, 0)),
            pl.BlockSpec((1, C), lambda i: (0, 0)),
            pl.BlockSpec((LO, C), lambda i: (0, 0)),
            pl.BlockSpec((1, 1), lambda i: (0, 0)),
        ],
        out_specs=pl.BlockSpec((g3, 1), lambda i: (i, 0)),
        compiler_params=pltpu.CompilerParams(
            dimension_semantics=("parallel",),
            vmem_limit_bytes=32 * 1024 * 1024),
    )(y2, s1, s2, b2, gamma, beta, wfc, bfc)


# -------------------------------------- glue --------------------------------------

def _phase_patches(x):
    """Phase-ordered conv1 im2col (+validity indicator), built once in XLA.

    x: (N, H, W, C) bf16  ->  (N, Hq*Wq, 4*(9C+1)) bf16,
    lane-block order of the phase planes is [(0,0), (1,0), (0,1), (1,1)];
    plane-padding rows are exactly zero (including the indicator column).
    """
    N, H, W, C = x.shape
    H1, W1 = H // 2, W // 2
    H2, W2 = H // 4, W // 4
    Hq, Wq = H2 + 2, W2 + 1
    XP = jnp.pad(x, ((0, 0), (3, 9), (3, 9), (0, 0)))   # XP[r] = xpad1[r-2] = x[r-3]
    ii = jnp.arange(Hq)
    jj = jnp.arange(Wq)
    pieces = []
    for (a, b) in ((0, 0), (1, 0), (0, 1), (1, 1)):
        oh = 2 * ii + a - 1
        ow = 2 * jj + b - 1
        m = ((oh >= 0) & (oh < H1))[:, None] & ((ow >= 0) & (ow < W1))[None, :]
        m = m.astype(x.dtype)[None, :, :, None]          # (1, Hq, Wq, 1)
        for kh in range(3):
            for kw in range(3):
                r0 = 2 * a + kh
                c0 = 2 * b + kw
                sl = XP[:, r0:r0 + 4 * Hq:4, c0:c0 + 4 * Wq:4, :]      # (N, Hq, Wq, C)
                pieces.append(sl * m)
        pieces.append(jnp.broadcast_to(m, (N, Hq, Wq, 1)))             # indicator / bias input
    q = jnp.concatenate(pieces, axis=-1)                               # (N, Hq, Wq, 4*(9C+1))
    return q.reshape(N, Hq * Wq, 4 * (9 * C + 1))


def init_params(key, image_size, channels):
    ks = jax.random.split(key, 8)
    H2 = image_size // 4
    feat = 128 * H2 * H2
    return {
        "w1": jax.random.normal(ks[0], (3, 3, channels, 64), jnp.float32) * 0.05,
        "b1": jax.random.normal(ks[1], (1, 64), jnp.float32) * 0.05,
        "w2": jax.random.normal(ks[2], (3, 3, 64, 128), jnp.float32) * 0.05,
        "b2": jax.random.normal(ks[3], (1, 128), jnp.float32) * 0.05,
        "gamma": 1.0 + jax.random.normal(ks[4], (1, 128), jnp.float32) * 0.05,
        "beta": jax.random.normal(ks[5], (1, 128), jnp.float32) * 0.05,
        # nn.Linear weight over NCHW-flattened features: index = c*H2*W2 + oh*W2 + ow
        "w_fc": jax.random.normal(ks[6], (feat,), jnp.float32) * 0.02,
        "b_fc": jax.random.normal(ks[7], (1, 1), jnp.float32) * 0.02,
    }


def prepare_kernel_params(p, image_size):
    """One-time re-layout of the PyTorch-style params into kernel-ready form."""
    channels = p["w1"].shape[2]
    H2 = W2 = image_size // 4
    Wq = W2 + 1
    K1 = 9 * channels + 1

    # conv1: block-diagonal weight (one (9C+1)-wide block per phase plane); the bias is the
    # last row of each block and multiplies the indicator column.
    w1e = jnp.concatenate([p["w1"].reshape(9 * channels, 64), p["b1"]], axis=0)   # (K1, 64)
    w1q = jnp.zeros((4 * K1, 256), jnp.float32)
    for blk in range(4):
        w1q = w1q.at[blk * K1:(blk + 1) * K1, blk * 64:(blk + 1) * 64].set(w1e)

    # conv2: taps grouped by phase-plane row offset and packed along the lane/K axis.
    # Phase-plane lane-block order is [(0,0), (1,0), (0,1), (1,1)].
    def tap(kh, kw):
        return p["w2"][kh, kw]                                         # (64, 128)

    z = jnp.zeros((64, 128), jnp.float32)
    wg0 = jnp.concatenate([tap(0, 0), tap(1, 0), tap(0, 1), tap(1, 1)], axis=0)  # off 0
    wg2 = jnp.concatenate([tap(2, 0), z,         tap(2, 1), z        ], axis=0)  # off Wq
    wg1 = jnp.concatenate([tap(0, 2), tap(1, 2)], axis=0)                         # off 1
    wg3 = jnp.concatenate([tap(2, 2), z        ], axis=0)                         # off Wq+1

    # FC: fold the NCHW flatten + the junk phase column into the weight (zero rows).
    w = p["w_fc"].reshape(128, H2, W2)                  # (c, oh, ow) -- torch flatten order
    w = jnp.transpose(w, (1, 2, 0))                     # (oh, ow, c)
    w = jnp.pad(w, ((0, 0), (0, Wq - W2), (0, 0)))      # (oh, Wq, c), junk column -> 0
    return {
        "w1q": w1q.astype(jnp.bfloat16),
        "w2a": jnp.stack([wg0, wg2]).astype(jnp.bfloat16),   # (2, 256, 128)
        "w2b": jnp.stack([wg1, wg3]).astype(jnp.bfloat16),   # (2, 128, 128)
        "b2": p["b2"],
        "gamma": p["gamma"],
        "beta": p["beta"],
        "wfc": w.reshape(H2 * Wq, 128),
        "bfc": p["b_fc"],
    }


@jax.jit
def discriminator_forward(img_nchw, kp):
    N, C, H, W = img_nchw.shape
    H2, W2 = H // 4, W // 4

    x = jnp.transpose(img_nchw, (0, 2, 3, 1)).astype(jnp.bfloat16)      # NCHW -> NHWC, bf16
    xq = _phase_patches(x)                                              # (N, R, 4*(9C+1))

    NB = NB_MAX if N >= NB_MAX else N
    Np = _round_up(N, NB)
    if Np != N:
        xq = jnp.pad(xq, ((0, Np - N), (0, 0), (0, 0)))                 # junk images -> zeros
    steps = Np // NB
    n_cores = 2 if (steps % 2 == 0 and steps >= 2) else 1               # v7x megacore split

    y2, s1, s2 = conv_fused(xq, kp["w1q"], kp["w2a"], kp["w2b"], kp["b2"],
                            NB=NB, n_real=N, H2=H2, W2=W2, n_cores=n_cores)

    # BatchNorm2d (training-mode batch stats) + LeakyReLU + Flatten + Linear + Sigmoid
    g3 = NB
    count = N * H2 * W2
    out = head(y2, s1, s2, kp["b2"], kp["gamma"], kp["beta"],
               kp["wfc"], kp["bfc"], g3, count)
    return out[:N]


if __name__ == "__main__":
    image_size = 16   # small, divisible by 4 (reference module uses 64)
    channels = 3
    batch = 2

    key = jax.random.PRNGKey(0)
    k_img, k_par = jax.random.split(key)
    img = jax.random.normal(k_img, (batch, channels, image_size, image_size), jnp.float32)

    params = init_params(k_par, image_size, channels)
    kparams = prepare_kernel_params(params, image_size)   # one-time re-layout

    out = discriminator_forward(img, kparams)
    out = jax.block_until_ready(out)

    assert out.shape == (batch, 1), out.shape
    assert bool(jnp.all(jnp.isfinite(out)))
    assert bool(jnp.all((out >= 0.0) & (out <= 1.0)))
    print("KERNEL_OK")
</pallas_src>

<mosaic_0001>
module attributes {stable_mosaic.version = 11 : i64} {
  func.func @kernel(%arg0: i32, %arg1: memref<2x20x128xbf16, #tpu.memory_space<vmem>>, %arg2: memref<8x128xf32, #tpu.memory_space<vmem>>, %arg3: memref<8x128xf32, #tpu.memory_space<vmem>>, %arg4: memref<1x128xf32, #tpu.memory_space<vmem>>, %arg5: memref<1x128xf32, #tpu.memory_space<vmem>>, %arg6: memref<1x128xf32, #tpu.memory_space<vmem>>, %arg7: memref<20x128xf32, #tpu.memory_space<vmem>>, %arg8: memref<1x1xf32, #tpu.memory_space<vmem>>, %arg9: memref<2x1xf32, #tpu.memory_space<vmem>>) attributes {dimension_semantics = [#tpu.dimension_semantics<parallel>], iteration_bounds = array<i64: 1>, scalar_prefetch = 0 : i64, scratch_operands = 0 : i64, tpu.core_type = #tpu.core_type<tc>, window_params = [{transform_indices = @transform_0, window_bounds = array<i64: 2, 20, 128>}, {pipeline_mode = #tpu.pipeline_mode<synchronous>, transform_indices = @transform_1, window_bounds = array<i64: 8, 128>}, {pipeline_mode = #tpu.pipeline_mode<synchronous>, transform_indices = @transform_2, window_bounds = array<i64: 8, 128>}, {pipeline_mode = #tpu.pipeline_mode<synchronous>, transform_indices = @transform_3, window_bounds = array<i64: 1, 128>}, {pipeline_mode = #tpu.pipeline_mode<synchronous>, transform_indices = @transform_4, window_bounds = array<i64: 1, 128>}, {pipeline_mode = #tpu.pipeline_mode<synchronous>, transform_indices = @transform_5, window_bounds = array<i64: 1, 128>}, {pipeline_mode = #tpu.pipeline_mode<synchronous>, transform_indices = @transform_6, window_bounds = array<i64: 20, 128>}, {pipeline_mode = #tpu.pipeline_mode<synchronous>, transform_indices = @transform_7, window_bounds = array<i64: 1, 1>}, {transform_indices = @transform_8, window_bounds = array<i64: 2, 1>}]} {
    %c0 = arith.constant 0 : index
    %c0_0 = arith.constant 0 : index
    %0 = vector.load %arg2[%c0, %c0_0] : memref<8x128xf32, #tpu.memory_space<vmem>>, vector<8x128xf32>
    %cst = arith.constant dense<0.000000e+00> : vector<128xf32>
    %1 = vector.multi_reduction <add>, %0, %cst [0] : vector<8x128xf32> to vector<128xf32>
    %2 = vector.shape_cast %1 : vector<128xf32> to vector<1x128xf32>
    %cst_1 = arith.constant 3.125000e-02 : f32
    %3 = vector.broadcast %cst_1 : f32 to vector<1x128xf32>
    %4 = arith.mulf %2, %3 : vector<1x128xf32>
    %c0_2 = arith.constant 0 : index
    %c0_3 = arith.constant 0 : index
    %5 = vector.load %arg3[%c0_2, %c0_3] : memref<8x128xf32, #tpu.memory_space<vmem>>, vector<8x128xf32>
    %cst_4 = arith.constant dense<0.000000e+00> : vector<128xf32>
    %6 = vector.multi_reduction <add>, %5, %cst_4 [0] : vector<8x128xf32> to vector<128xf32>
    %7 = vector.shape_cast %6 : vector<128xf32> to vector<1x128xf32>
    %cst_5 = arith.constant 3.125000e-02 : f32
    %8 = vector.broadcast %cst_5 : f32 to vector<1x128xf32>
    %9 = arith.mulf %7, %8 : vector<1x128xf32>
    %10 = arith.mulf %4, %4 : vector<1x128xf32>
    %11 = arith.subf %9, %10 : vector<1x128xf32>
    %c0_6 = arith.constant 0 : index
    %c0_7 = arith.constant 0 : index
    %12 = vector.load %arg4[%c0_6, %c0_7] : memref<1x128xf32, #tpu.memory_space<vmem>>, vector<1x128xf32>
    %13 = arith.addf %4, %12 : vector<1x128xf32>
    %c0_8 = arith.constant 0 : index
    %c0_9 = arith.constant 0 : index
    %14 = vector.load %arg5[%c0_8, %c0_9] : memref<1x128xf32, #tpu.memory_space<vmem>>, vector<1x128xf32>
    %cst_10 = arith.constant 9.99999974E-6 : f32
    %15 = vector.broadcast %cst_10 : f32 to vector<1x128xf32>
    %16 = arith.addf %11, %15 : vector<1x128xf32>
    %17 = math.rsqrt %16 : vector<1x128xf32>
    %18 = arith.mulf %14, %17 : vector<1x128xf32>
    %c0_11 = arith.constant 0 : index
    %c0_12 = arith.constant 0 : index
    %19 = vector.load %arg6[%c0_11, %c0_12] : memref<1x128xf32, #tpu.memory_space<vmem>>, vector<1x128xf32>
    %20 = arith.mulf %13, %18 : vector<1x128xf32>
    %21 = arith.subf %19, %20 : vector<1x128xf32>
    %c0_13 = arith.constant 0 : index
    %c0_14 = arith.constant 0 : index
    %c0_15 = arith.constant 0 : index
    %22 = vector.load %arg1[%c0_13, %c0_14, %c0_15] : memref<2x20x128xbf16, #tpu.memory_space<vmem>>, vector<2x20x128xbf16>
    %23 = arith.extf %22 : vector<2x20x128xbf16> to vector<2x20x128xf32>
    %24 = vector.shape_cast %18 : vector<1x128xf32> to vector<1x1x128xf32>
    %25 = vector.broadcast %24 : vector<1x1x128xf32> to vector<2x20x128xf32>
    %26 = arith.mulf %23, %25 : vector<2x20x128xf32>
    %27 = vector.shape_cast %21 : vector<1x128xf32> to vector<1x1x128xf32>
    %28 = vector.broadcast %27 : vector<1x1x128xf32> to vector<2x20x128xf32>
    %29 = arith.addf %26, %28 : vector<2x20x128xf32>
    %cst_16 = arith.constant 0.000000e+00 : f32
    %30 = vector.broadcast %cst_16 : f32 to vector<2x20x128xf32>
    %31 = arith.cmpf ogt, %29, %30 : vector<2x20x128xf32>
    %cst_17 = arith.constant 2.000000e-01 : f32
    %32 = vector.broadcast %cst_17 : f32 to vector<2x20x128xf32>
    %33 = arith.mulf %32, %29 : vector<2x20x128xf32>
    %34 = arith.select %31, %29, %33 : vector<2x20x128xi1>, vector<2x20x128xf32>
    %c0_18 = arith.constant 0 : index
    %c0_19 = arith.constant 0 : index
    %35 = vector.load %arg7[%c0_18, %c0_19] : memref<20x128xf32, #tpu.memory_space<vmem>>, vector<20x128xf32>
    %36 = vector.shape_cast %35 : vector<20x128xf32> to vector<1x20x128xf32>
    %37 = vector.broadcast %36 : vector<1x20x128xf32> to vector<2x20x128xf32>
    %38 = arith.mulf %34, %37 : vector<2x20x128xf32>
    %cst_20 = arith.constant dense<0.000000e+00> : vector<2x20xf32>
    %39 = vector.multi_reduction <add>, %38, %cst_20 [2] : vector<2x20x128xf32> to vector<2x20xf32>
    %cst_21 = arith.constant dense<0.000000e+00> : vector<2xf32>
    %40 = vector.multi_reduction <add>, %39, %cst_21 [1] : vector<2x20xf32> to vector<2xf32>
    %41 = vector.shape_cast %40 : vector<2xf32> to vector<2x1xf32>
    %c0_22 = arith.constant 0 : index
    %c0_23 = arith.constant 0 : index
    %42 = vector.load %arg8[%c0_22, %c0_23] : memref<1x1xf32, #tpu.memory_space<vmem>>, vector<1x1xf32>
    %43 = vector.broadcast %42 : vector<1x1xf32> to vector<2x1xf32>
    %44 = arith.addf %41, %43 : vector<2x1xf32>
    %45 = math.absf %44 : vector<2x1xf32>
    %cst_24 = arith.constant 0.000000e+00 : f32
    %46 = vector.broadcast %cst_24 : f32 to vector<2x1xf32>
    %47 = arith.subf %46, %45 : vector<2x1xf32>
    %48 = math.exp %47 : vector<2x1xf32>
    %cst_25 = arith.constant 1.000000e+00 : f32
    %49 = vector.broadcast %cst_25 : f32 to vector<2x1xf32>
    %50 = arith.addf %49, %48 : vector<2x1xf32>
    %cst_26 = arith.constant 1.000000e+00 : f32
    %51 = vector.broadcast %cst_26 : f32 to vector<2x1xf32>
    %52 = arith.divf %51, %50 : vector<2x1xf32>
    %cst_27 = arith.constant 0.000000e+00 : f32
    %53 = vector.broadcast %cst_27 : f32 to vector<2x1xf32>
    %54 = arith.cmpf oge, %44, %53 : vector<2x1xf32>
    %cst_28 = arith.constant 1.000000e+00 : f32
    %55 = vector.broadcast %cst_28 : f32 to vector<2x1xf32>
    %56 = arith.subf %55, %52 : vector<2x1xf32>
    %57 = arith.select %54, %52, %56 : vector<2x1xi1>, vector<2x1xf32>
    %c0_29 = arith.constant 0 : index
    %c0_30 = arith.constant 0 : index
    %58 = vector.load %arg9[%c0_29, %c0_30] : memref<2x1xf32, #tpu.memory_space<vmem>>, vector<2x1xf32>
    tpu.vector_store %arg9[%c0_29, %c0_30], %57 {strides = array<i32>} : memref<2x1xf32, #tpu.memory_space<vmem>>, vector<2x1xf32>,
    return
  }
  func.func @transform_0(%arg0: i32) -> (i32, i32, i32) {
    %c0_i32 = arith.constant 0 : i32
    %c0_i32_0 = arith.constant 0 : i32
    %c0_i32_1 = arith.constant 0 : i32
    return %arg0, %c0_i32, %c0_i32_0 : i32, i32, i32
  }
  func.func @transform_1(%arg0: i32) -> (i32, i32) {
    %c0_i32 = arith.constant 0 : i32
    %c0_i32_0 = arith.constant 0 : i32
    %c0_i32_1 = arith.constant 0 : i32
    return %c0_i32, %c0_i32_0 : i32, i32
  }
  func.func @transform_2(%arg0: i32) -> (i32, i32) {
    %c0_i32 = arith.constant 0 : i32
    %c0_i32_0 = arith.constant 0 : i32
    %c0_i32_1 = arith.constant 0 : i32
    return %c0_i32, %c0_i32_0 : i32, i32
  }
  func.func @transform_3(%arg0: i32) -> (i32, i32) {
    %c0_i32 = arith.constant 0 : i32
    %c0_i32_0 = arith.constant 0 : i32
    %c0_i32_1 = arith.constant 0 : i32
    return %c0_i32, %c0_i32_0 : i32, i32
  }
  func.func @transform_4(%arg0: i32) -> (i32, i32) {
    %c0_i32 = arith.constant 0 : i32
    %c0_i32_0 = arith.constant 0 : i32
    %c0_i32_1 = arith.constant 0 : i32
    return %c0_i32, %c0_i32_0 : i32, i32
  }
  func.func @transform_5(%arg0: i32) -> (i32, i32) {
    %c0_i32 = arith.constant 0 : i32
    %c0_i32_0 = arith.constant 0 : i32
    %c0_i32_1 = arith.constant 0 : i32
    return %c0_i32, %c0_i32_0 : i32, i32
  }
  func.func @transform_6(%arg0: i32) -> (i32, i32) {
    %c0_i32 = arith.constant 0 : i32
    %c0_i32_0 = arith.constant 0 : i32
    %c0_i32_1 = arith.constant 0 : i32
    return %c0_i32, %c0_i32_0 : i32, i32
  }
  func.func @transform_7(%arg0: i32) -> (i32, i32) {
    %c0_i32 = arith.constant 0 : i32
    %c0_i32_0 = arith.constant 0 : i32
    %c0_i32_1 = arith.constant 0 : i32
    return %c0_i32, %c0_i32_0 : i32, i32
  }
  func.func @transform_8(%arg0: i32) -> (i32, i32) {
    %c0_i32 = arith.constant 0 : i32
    %c0_i32_0 = arith.constant 0 : i32
    return %arg0, %c0_i32 : i32, i32
  }
}

module attributes {stable_mosaic.version = 11 : i64} {
  func.func @kernel(%arg0: i32, %arg1: i32, %arg2: memref<2x30x112xbf16, #tpu.memory_space<vmem>>, %arg3: memref<112x256xbf16, #tpu.memory_space<vmem>>, %arg4: memref<2x256x128xbf16, #tpu.memory_space<vmem>>, %arg5: memref<2x128x128xbf16, #tpu.memory_space<vmem>>, %arg6: memref<1x128xf32, #tpu.memory_space<vmem>>, %arg7: memref<2x20x128xbf16, #tpu.memory_space<vmem>>, %arg8: memref<8x128xf32, #tpu.memory_space<vmem>>, %arg9: memref<8x128xf32, #tpu.memory_space<vmem>>, %arg10: memref<30x256xbf16, #tpu.memory_space<vmem>>) attributes {dimension_semantics = [#tpu.dimension_semantics<parallel>, #tpu.dimension_semantics<arbitrary>], iteration_bounds = array<i64: 1, 1>, scalar_prefetch = 0 : i64, scratch_operands = 1 : i64, tpu.core_type = #tpu.core_type<tc>, window_params = [{transform_indices = @transform_0, window_bounds = array<i64: 2, 30, 112>}, {pipeline_mode = #tpu.pipeline_mode<synchronous>, transform_indices = @transform_1, window_bounds = array<i64: 112, 256>}, {pipeline_mode = #tpu.pipeline_mode<synchronous>, transform_indices = @transform_2, window_bounds = array<i64: 2, 256, 128>}, {pipeline_mode = #tpu.pipeline_mode<synchronous>, transform_indices = @transform_3, window_bounds = array<i64: 2, 128, 128>}, {pipeline_mode = #tpu.pipeline_mode<synchronous>, transform_indices = @transform_4, window_bounds = array<i64: 1, 128>}, {transform_indices = @transform_5, window_bounds = array<i64: 2, 20, 128>}, {transform_indices = @transform_6, window_bounds = array<i64: 8, 128>}, {transform_indices = @transform_7, window_bounds = array<i64: 8, 128>}]} {
    %c0_i32 = arith.constant 0 : i32
    %0 = arith.cmpi eq, %arg1, %c0_i32 : i32
    %1 = arith.extui %0 : i1 to i32
    %c0_i32_0 = arith.constant 0 : i32
    %2 = arith.cmpi ne, %1, %c0_i32_0 : i32
    scf.if %2 {
      %cst_104 = arith.constant 0.000000e+00 : f32
      %167 = vector.broadcast %cst_104 : f32 to vector<8x128xf32>
      %c0_105 = arith.constant 0 : index
      %c0_106 = arith.constant 0 : index
      %168 = vector.load %arg8[%c0_105, %c0_106] : memref<8x128xf32, #tpu.memory_space<vmem>>, vector<8x128xf32>
      tpu.vector_store %arg8[%c0_105, %c0_106], %167 {strides = array<i32>} : memref<8x128xf32, #tpu.memory_space<vmem>>, vector<8x128xf32>,
      %cst_107 = arith.constant 0.000000e+00 : f32
      %169 = vector.broadcast %cst_107 : f32 to vector<8x128xf32>
      %c0_108 = arith.constant 0 : index
      %c0_109 = arith.constant 0 : index
      %170 = vector.load %arg9[%c0_108, %c0_109] : memref<8x128xf32, #tpu.memory_space<vmem>>, vector<8x128xf32>
      tpu.vector_store %arg9[%c0_108, %c0_109], %169 {strides = array<i32>} : memref<8x128xf32, #tpu.memory_space<vmem>>, vector<8x128xf32>,
    } else {
    }
    %c0 = arith.constant 0 : index
    %c0_1 = arith.constant 0 : index
    %3 = vector.load %arg6[%c0, %c0_1] : memref<1x128xf32, #tpu.memory_space<vmem>>, vector<1x128xf32>
    %c0_2 = arith.constant 0 : index
    %c0_3 = arith.constant 0 : index
    %c0_4 = arith.constant 0 : index
    %4 = vector.load %arg4[%c0_2, %c0_3, %c0_4] : memref<2x256x128xbf16, #tpu.memory_space<vmem>>, vector<1x256x128xbf16>
    %5 = vector.shape_cast %4 : vector<1x256x128xbf16> to vector<256x128xbf16>
    %c1 = arith.constant 1 : index
    %c0_5 = arith.constant 0 : index
    %c0_6 = arith.constant 0 : index
    %6 = vector.load %arg4[%c1, %c0_5, %c0_6] : memref<2x256x128xbf16, #tpu.memory_space<vmem>>, vector<1x256x128xbf16>
    %7 = vector.shape_cast %6 : vector<1x256x128xbf16> to vector<256x128xbf16>
    %c0_7 = arith.constant 0 : index
    %c0_8 = arith.constant 0 : index
    %c0_9 = arith.constant 0 : index
    %8 = vector.load %arg5[%c0_7, %c0_8, %c0_9] : memref<2x128x128xbf16, #tpu.memory_space<vmem>>, vector<1x128x128xbf16>
    %9 = vector.shape_cast %8 : vector<1x128x128xbf16> to vector<128x128xbf16>
    %c1_10 = arith.constant 1 : index
    %c0_11 = arith.constant 0 : index
    %c0_12 = arith.constant 0 : index
    %10 = vector.load %arg5[%c1_10, %c0_11, %c0_12] : memref<2x128x128xbf16, #tpu.memory_space<vmem>>, vector<1x128x128xbf16>
    %11 = vector.shape_cast %10 : vector<1x128x128xbf16> to vector<128x128xbf16>
    %c1_i32 = arith.constant 1 : i32
    %12 = arith.muli %arg0, %c1_i32 : i32
    %13 = arith.addi %12, %arg1 : i32
    %c2_i32 = arith.constant 2 : i32
    %14 = arith.muli %13, %c2_i32 : i32
    %c0_13 = arith.constant 0 : index
    %c0_14 = arith.constant 0 : index
    %c0_15 = arith.constant 0 : index
    %15 = vector.load %arg2[%c0_13, %c0_14, %c0_15] : memref<2x30x112xbf16, #tpu.memory_space<vmem>>, vector<1x30x112xbf16>
    %16 = vector.shape_cast %15 : vector<1x30x112xbf16> to vector<30x112xbf16>
    %c0_16 = arith.constant 0 : index
    %c0_17 = arith.constant 0 : index
    %17 = vector.load %arg3[%c0_16, %c0_17] : memref<112x256xbf16, #tpu.memory_space<vmem>>, vector<112x256xbf16>
    %cst = arith.constant dense<0.000000e+00> : vector<30x256xf32>
    %18 = tpu.matmul %16, %17, %cst {dimension_numbers = #tpu.dot_dimension_numbers<[1], [0], [0], [1], [0, 0, 1, 1], [], []>} : vector<30x112xbf16>, vector<112x256xbf16>, vector<30x256xf32> -> vector<30x256xf32>
    %cst_18 = arith.constant 0.000000e+00 : f32
    %19 = vector.broadcast %cst_18 : f32 to vector<30x256xf32>
    %20 = arith.cmpf ogt, %18, %19 : vector<30x256xf32>
    %cst_19 = arith.constant 2.000000e-01 : f32
    %21 = vector.broadcast %cst_19 : f32 to vector<30x256xf32>
    %22 = arith.mulf %21, %18 : vector<30x256xf32>
    %23 = arith.select %20, %18, %22 : vector<30x256xi1>, vector<30x256xf32>
    %24 = arith.truncf %23 : vector<30x256xf32> to vector<30x256xbf16>
    %c0_20 = arith.constant 0 : index
    %c0_21 = arith.constant 0 : index
    %25 = vector.load %arg10[%c0_20, %c0_21] : memref<30x256xbf16, #tpu.memory_space<vmem>>, vector<30x256xbf16>
    tpu.vector_store %arg10[%c0_20, %c0_21], %24 {strides = array<i32>} : memref<30x256xbf16, #tpu.memory_space<vmem>>, vector<30x256xbf16>,
    %c0_i32_22 = arith.constant 0 : i32
    %26 = arith.addi %14, %c0_i32_22 : i32
    %c2_i32_23 = arith.constant 2 : i32
    %27 = arith.cmpi slt, %26, %c2_i32_23 : i32
    %28 = arith.extui %27 : i1 to i32
    %29 = arith.sitofp %28 : i32 to f32
    %cst_24 = arith.constant 0.000000e+00 : f32
    %30 = vector.broadcast %cst_24 : f32 to vector<1x128xf32>
    %cst_25 = arith.constant 0.000000e+00 : f32
    %31 = vector.broadcast %cst_25 : f32 to vector<1x128xf32>
    %c0_26 = arith.constant 0 : index
    %c0_27 = arith.constant 0 : index
    %32 = vector.load %arg10[%c0_26, %c0_27] : memref<30x256xbf16, #tpu.memory_space<vmem>>, vector<20x256xbf16>
    %cst_28 = arith.constant dense<0.000000e+00> : vector<20x128xf32>
    %33 = tpu.matmul %32, %5, %cst_28 {dimension_numbers = #tpu.dot_dimension_numbers<[1], [0], [0], [1], [0, 0, 1, 1], [], []>} : vector<20x256xbf16>, vector<256x128xbf16>, vector<20x128xf32> -> vector<20x128xf32>
    %c1_29 = arith.constant 1 : index
    %c0_30 = arith.constant 0 : index
    %34 = vector.load %arg10[%c1_29, %c0_30] : memref<30x256xbf16, #tpu.memory_space<vmem>>, vector<20x128xbf16>
    %cst_31 = arith.constant dense<0.000000e+00> : vector<20x128xf32>
    %35 = tpu.matmul %34, %9, %cst_31 {dimension_numbers = #tpu.dot_dimension_numbers<[1], [0], [0], [1], [0, 0, 1, 1], [], []>} : vector<20x128xbf16>, vector<128x128xbf16>, vector<20x128xf32> -> vector<20x128xf32>
    %36 = arith.addf %33, %35 : vector<20x128xf32>
    %c5 = arith.constant 5 : index
    %c0_32 = arith.constant 0 : index
    %37 = vector.load %arg10[%c5, %c0_32] : memref<30x256xbf16, #tpu.memory_space<vmem>>, vector<20x256xbf16>
    %cst_33 = arith.constant dense<0.000000e+00> : vector<20x128xf32>
    %38 = tpu.matmul %37, %7, %cst_33 {dimension_numbers = #tpu.dot_dimension_numbers<[1], [0], [0], [1], [0, 0, 1, 1], [], []>} : vector<20x256xbf16>, vector<256x128xbf16>, vector<20x128xf32> -> vector<20x128xf32>
    %39 = arith.addf %36, %38 : vector<20x128xf32>
    %c6 = arith.constant 6 : index
    %c0_34 = arith.constant 0 : index
    %40 = vector.load %arg10[%c6, %c0_34] : memref<30x256xbf16, #tpu.memory_space<vmem>>, vector<20x128xbf16>
    %cst_35 = arith.constant dense<0.000000e+00> : vector<20x128xf32>
    %41 = tpu.matmul %40, %11, %cst_35 {dimension_numbers = #tpu.dot_dimension_numbers<[1], [0], [0], [1], [0, 0, 1, 1], [], []>} : vector<20x128xbf16>, vector<128x128xbf16>, vector<20x128xf32> -> vector<20x128xf32>
    %42 = arith.addf %39, %41 : vector<20x128xf32>
    %43 = tpu.iota {dimensions = array<i32: 0>} : vector<20x1xi32>
    %c0_i32_36 = arith.constant 0 : i32
    %44 = vector.broadcast %c0_i32_36 : i32 to vector<20x1xi32>
    %45 = arith.addi %44, %43 : vector<20x1xi32>
    %c5_i32 = arith.constant 5 : i32
    %c0_i32_37 = arith.constant 0 : i32
    %46 = arith.cmpi eq, %c5_i32, %c0_i32_37 : i32
    %c1_i32_38 = arith.constant 1 : i32
    %47 = arith.select %46, %c1_i32_38, %c5_i32 : i32
    %48 = vector.broadcast %47 : i32 to vector<20x1xi32>
    %49 = arith.remsi %45, %48 : vector<20x1xi32>
    %c0_i32_39 = arith.constant 0 : i32
    %50 = vector.broadcast %c0_i32_39 : i32 to vector<20x1xi32>
    %51 = arith.cmpi ne, %49, %50 : vector<20x1xi32>
    %c0_i32_40 = arith.constant 0 : i32
    %52 = vector.broadcast %c0_i32_40 : i32 to vector<20x1xi32>
    %53 = arith.cmpi slt, %49, %52 : vector<20x1xi32>
    %c0_i32_41 = arith.constant 0 : i32
    %54 = arith.cmpi slt, %47, %c0_i32_41 : i32
    %55 = vector.broadcast %54 : i1 to vector<20x1xi1>
    %56 = vector.broadcast %55 : vector<20x1xi1> to vector<20x1xi1>
    %57 = arith.xori %53, %56 : vector<20x1xi1>
    %58 = arith.andi %57, %51 : vector<20x1xi1>
    %59 = vector.broadcast %47 : i32 to vector<20x1xi32>
    %60 = arith.addi %49, %59 : vector<20x1xi32>
    %61 = arith.select %58, %60, %49 : vector<20x1xi1>, vector<20x1xi32>
    %c4_i32 = arith.constant 4 : i32
    %62 = vector.broadcast %c4_i32 : i32 to vector<20x1xi32>
    %63 = arith.cmpi slt, %61, %62 : vector<20x1xi32>
    %cst_42 = arith.constant 0.000000e+00 : f32
    %64 = vector.shape_cast %63 : vector<20x1xi1> to vector<20x1xi1>
    %65 = vector.broadcast %64 : vector<20x1xi1> to vector<20x128xi1>
    %66 = vector.broadcast %cst_42 : f32 to vector<20x128xf32>
    %67 = arith.select %65, %42, %66 : vector<20x128xi1>, vector<20x128xf32>
    %cst_43 = arith.constant dense<0.000000e+00> : vector<128xf32>
    %68 = vector.multi_reduction <add>, %67, %cst_43 [0] : vector<20x128xf32> to vector<128xf32>
    %69 = vector.shape_cast %68 : vector<128xf32> to vector<1x128xf32>
    %70 = arith.addf %30, %69 : vector<1x128xf32>
    %71 = arith.mulf %67, %67 : vector<20x128xf32>
    %cst_44 = arith.constant dense<0.000000e+00> : vector<128xf32>
    %72 = vector.multi_reduction <add>, %71, %cst_44 [0] : vector<20x128xf32> to vector<128xf32>
    %73 = vector.shape_cast %72 : vector<128xf32> to vector<1x128xf32>
    %74 = arith.addf %31, %73 : vector<1x128xf32>
    %75 = vector.broadcast %3 : vector<1x128xf32> to vector<20x128xf32>
    %76 = arith.addf %42, %75 : vector<20x128xf32>
    %77 = arith.truncf %76 : vector<20x128xf32> to vector<20x128xbf16>
    %c0_45 = arith.constant 0 : index
    %c0_46 = arith.constant 0 : index
    %c0_47 = arith.constant 0 : index
    %78 = vector.load %arg7[%c0_45, %c0_46, %c0_47] : memref<2x20x128xbf16, #tpu.memory_space<vmem>>, vector<1x20x128xbf16>
    %79 = vector.shape_cast %78 : vector<1x20x128xbf16> to vector<20x128xbf16>
    %80 = vector.shape_cast %77 : vector<20x128xbf16> to vector<1x20x128xbf16>
    tpu.vector_store %arg7[%c0_45, %c0_46, %c0_47], %80 {strides = array<i32>} : memref<2x20x128xbf16, #tpu.memory_space<vmem>>, vector<1x20x128xbf16>,
    %c0_48 = arith.constant 0 : index
    %c0_49 = arith.constant 0 : index
    %81 = vector.load %arg8[%c0_48, %c0_49] : memref<8x128xf32, #tpu.memory_space<vmem>>, vector<1x128xf32>
    %82 = vector.broadcast %29 : f32 to vector<1x128xf32>
    %83 = arith.mulf %82, %70 : vector<1x128xf32>
    %84 = arith.addf %81, %83 : vector<1x128xf32>
    %c0_50 = arith.constant 0 : index
    %c0_51 = arith.constant 0 : index
    %85 = vector.load %arg8[%c0_50, %c0_51] : memref<8x128xf32, #tpu.memory_space<vmem>>, vector<1x128xf32>
    tpu.vector_store %arg8[%c0_50, %c0_51], %84 {strides = array<i32>} : memref<8x128xf32, #tpu.memory_space<vmem>>, vector<1x128xf32>,
    %c0_52 = arith.constant 0 : index
    %c0_53 = arith.constant 0 : index
    %86 = vector.load %arg9[%c0_52, %c0_53] : memref<8x128xf32, #tpu.memory_space<vmem>>, vector<1x128xf32>
    %87 = vector.broadcast %29 : f32 to vector<1x128xf32>
    %88 = arith.mulf %87, %74 : vector<1x128xf32>
    %89 = arith.addf %86, %88 : vector<1x128xf32>
    %c0_54 = arith.constant 0 : index
    %c0_55 = arith.constant 0 : index
    %90 = vector.load %arg9[%c0_54, %c0_55] : memref<8x128xf32, #tpu.memory_space<vmem>>, vector<1x128xf32>
    tpu.vector_store %arg9[%c0_54, %c0_55], %89 {strides = array<i32>} : memref<8x128xf32, #tpu.memory_space<vmem>>, vector<1x128xf32>,
    %c1_56 = arith.constant 1 : index
    %c0_57 = arith.constant 0 : index
    %c0_58 = arith.constant 0 : index
    %91 = vector.load %arg2[%c1_56, %c0_57, %c0_58] : memref<2x30x112xbf16, #tpu.memory_space<vmem>>, vector<1x30x112xbf16>
    %92 = vector.shape_cast %91 : vector<1x30x112xbf16> to vector<30x112xbf16>
    %c0_59 = arith.constant 0 : index
    %c0_60 = arith.constant 0 : index
    %93 = vector.load %arg3[%c0_59, %c0_60] : memref<112x256xbf16, #tpu.memory_space<vmem>>, vector<112x256xbf16>
    %cst_61 = arith.constant dense<0.000000e+00> : vector<30x256xf32>
    %94 = tpu.matmul %92, %93, %cst_61 {dimension_numbers = #tpu.dot_dimension_numbers<[1], [0], [0], [1], [0, 0, 1, 1], [], []>} : vector<30x112xbf16>, vector<112x256xbf16>, vector<30x256xf32> -> vector<30x256xf32>
    %cst_62 = arith.constant 0.000000e+00 : f32
    %95 = vector.broadcast %cst_62 : f32 to vector<30x256xf32>
    %96 = arith.cmpf ogt, %94, %95 : vector<30x256xf32>
    %cst_63 = arith.constant 2.000000e-01 : f32
    %97 = vector.broadcast %cst_63 : f32 to vector<30x256xf32>
    %98 = arith.mulf %97, %94 : vector<30x256xf32>
    %99 = arith.select %96, %94, %98 : vector<30x256xi1>, vector<30x256xf32>
    %100 = arith.truncf %99 : vector<30x256xf32> to vector<30x256xbf16>
    %c0_64 = arith.constant 0 : index
    %c0_65 = arith.constant 0 : index
    %101 = vector.load %arg10[%c0_64, %c0_65] : memref<30x256xbf16, #tpu.memory_space<vmem>>, vector<30x256xbf16>
    tpu.vector_store %arg10[%c0_64, %c0_65], %100 {strides = array<i32>} : memref<30x256xbf16, #tpu.memory_space<vmem>>, vector<30x256xbf16>,
    %c1_i32_66 = arith.constant 1 : i32
    %102 = arith.addi %14, %c1_i32_66 : i32
    %c2_i32_67 = arith.constant 2 : i32
    %103 = arith.cmpi slt, %102, %c2_i32_67 : i32
    %104 = arith.extui %103 : i1 to i32
    %105 = arith.sitofp %104 : i32 to f32
    %cst_68 = arith.constant 0.000000e+00 : f32
    %106 = vector.broadcast %cst_68 : f32 to vector<1x128xf32>
    %cst_69 = arith.constant 0.000000e+00 : f32
    %107 = vector.broadcast %cst_69 : f32 to vector<1x128xf32>
    %c0_70 = arith.constant 0 : index
    %c0_71 = arith.constant 0 : index
    %108 = vector.load %arg10[%c0_70, %c0_71] : memref<30x256xbf16, #tpu.memory_space<vmem>>, vector<20x256xbf16>
    %cst_72 = arith.constant dense<0.000000e+00> : vector<20x128xf32>
    %109 = tpu.matmul %108, %5, %cst_72 {dimension_numbers = #tpu.dot_dimension_numbers<[1], [0], [0], [1], [0, 0, 1, 1], [], []>} : vector<20x256xbf16>, vector<256x128xbf16>, vector<20x128xf32> -> vector<20x128xf32>
    %c1_73 = arith.constant 1 : index
    %c0_74 = arith.constant 0 : index
    %110 = vector.load %arg10[%c1_73, %c0_74] : memref<30x256xbf16, #tpu.memory_space<vmem>>, vector<20x128xbf16>
    %cst_75 = arith.constant dense<0.000000e+00> : vector<20x128xf32>
    %111 = tpu.matmul %110, %9, %cst_75 {dimension_numbers = #tpu.dot_dimension_numbers<[1], [0], [0], [1], [0, 0, 1, 1], [], []>} : vector<20x128xbf16>, vector<128x128xbf16>, vector<20x128xf32> -> vector<20x128xf32>
    %112 = arith.addf %109, %111 : vector<20x128xf32>
    %c5_76 = arith.constant 5 : index
    %c0_77 = arith.constant 0 : index
    %113 = vector.load %arg10[%c5_76, %c0_77] : memref<30x256xbf16, #tpu.memory_space<vmem>>, vector<20x256xbf16>
    %cst_78 = arith.constant dense<0.000000e+00> : vector<20x128xf32>
    %114 = tpu.matmul %113, %7, %cst_78 {dimension_numbers = #tpu.dot_dimension_numbers<[1], [0], [0], [1], [0, 0, 1, 1], [], []>} : vector<20x256xbf16>, vector<256x128xbf16>, vector<20x128xf32> -> vector<20x128xf32>
    %115 = arith.addf %112, %114 : vector<20x128xf32>
    %c6_79 = arith.constant 6 : index
    %c0_80 = arith.constant 0 : index
    %116 = vector.load %arg10[%c6_79, %c0_80] : memref<30x256xbf16, #tpu.memory_space<vmem>>, vector<20x128xbf16>
    %cst_81 = arith.constant dense<0.000000e+00> : vector<20x128xf32>
    %117 = tpu.matmul %116, %11, %cst_81 {dimension_numbers = #tpu.dot_dimension_numbers<[1], [0], [0], [1], [0, 0, 1, 1], [], []>} : vector<20x128xbf16>, vector<128x128xbf16>, vector<20x128xf32> -> vector<20x128xf32>
    %118 = arith.addf %115, %117 : vector<20x128xf32>
    %119 = tpu.iota {dimensions = array<i32: 0>} : vector<20x1xi32>
    %c0_i32_82 = arith.constant 0 : i32
    %120 = vector.broadcast %c0_i32_82 : i32 to vector<20x1xi32>
    %121 = arith.addi %120, %119 : vector<20x1xi32>
    %c5_i32_83 = arith.constant 5 : i32
    %c0_i32_84 = arith.constant 0 : i32
    %122 = arith.cmpi eq, %c5_i32_83, %c0_i32_84 : i32
    %c1_i32_85 = arith.constant 1 : i32
    %123 = arith.select %122, %c1_i32_85, %c5_i32_83 : i32
    %124 = vector.broadcast %123 : i32 to vector<20x1xi32>
    %125 = arith.remsi %121, %124 : vector<20x1xi32>
    %c0_i32_86 = arith.constant 0 : i32
    %126 = vector.broadcast %c0_i32_86 : i32 to vector<20x1xi32>
    %127 = arith.cmpi ne, %125, %126 : vector<20x1xi32>
    %c0_i32_87 = arith.constant 0 : i32
    %128 = vector.broadcast %c0_i32_87 : i32 to vector<20x1xi32>
    %129 = arith.cmpi slt, %125, %128 : vector<20x1xi32>
    %c0_i32_88 = arith.constant 0 : i32
    %130 = arith.cmpi slt, %123, %c0_i32_88 : i32
    %131 = vector.broadcast %130 : i1 to vector<20x1xi1>
    %132 = vector.broadcast %131 : vector<20x1xi1> to vector<20x1xi1>
    %133 = arith.xori %129, %132 : vector<20x1xi1>
    %134 = arith.andi %133, %127 : vector<20x1xi1>
    %135 = vector.broadcast %123 : i32 to vector<20x1xi32>
    %136 = arith.addi %125, %135 : vector<20x1xi32>
    %137 = arith.select %134, %136, %125 : vector<20x1xi1>, vector<20x1xi32>
    %c4_i32_89 = arith.constant 4 : i32
    %138 = vector.broadcast %c4_i32_89 : i32 to vector<20x1xi32>
    %139 = arith.cmpi slt, %137, %138 : vector<20x1xi32>
    %cst_90 = arith.constant 0.000000e+00 : f32
    %140 = vector.shape_cast %139 : vector<20x1xi1> to vector<20x1xi1>
    %141 = vector.broadcast %140 : vector<20x1xi1> to vector<20x128xi1>
    %142 = vector.broadcast %cst_90 : f32 to vector<20x128xf32>
    %143 = arith.select %141, %118, %142 : vector<20x128xi1>, vector<20x128xf32>
    %cst_91 = arith.constant dense<0.000000e+00> : vector<128xf32>
    %144 = vector.multi_reduction <add>, %143, %cst_91 [0] : vector<20x128xf32> to vector<128xf32>
    %145 = vector.shape_cast %144 : vector<128xf32> to vector<1x128xf32>
    %146 = arith.addf %106, %145 : vector<1x128xf32>
    %147 = arith.mulf %143, %143 : vector<20x128xf32>
    %cst_92 = arith.constant dense<0.000000e+00> : vector<128xf32>
    %148 = vector.multi_reduction <add>, %147, %cst_92 [0] : vector<20x128xf32> to vector<128xf32>
    %149 = vector.shape_cast %148 : vector<128xf32> to vector<1x128xf32>
    %150 = arith.addf %107, %149 : vector<1x128xf32>
    %151 = vector.broadcast %3 : vector<1x128xf32> to vector<20x128xf32>
    %152 = arith.addf %118, %151 : vector<20x128xf32>
    %153 = arith.truncf %152 : vector<20x128xf32> to vector<20x128xbf16>
    %c1_93 = arith.constant 1 : index
    %c0_94 = arith.constant 0 : index
    %c0_95 = arith.constant 0 : index
    %154 = vector.load %arg7[%c1_93, %c0_94, %c0_95] : memref<2x20x128xbf16, #tpu.memory_space<vmem>>, vector<1x20x128xbf16>
    %155 = vector.shape_cast %154 : vector<1x20x128xbf16> to vector<20x128xbf16>
    %156 = vector.shape_cast %153 : vector<20x128xbf16> to vector<1x20x128xbf16>
    tpu.vector_store %arg7[%c1_93, %c0_94, %c0_95], %156 {strides = array<i32>} : memref<2x20x128xbf16, #tpu.memory_space<vmem>>, vector<1x20x128xbf16>,
    %c0_96 = arith.constant 0 : index
    %c0_97 = arith.constant 0 : index
    %157 = vector.load %arg8[%c0_96, %c0_97] : memref<8x128xf32, #tpu.memory_space<vmem>>, vector<1x128xf32>
    %158 = vector.broadcast %105 : f32 to vector<1x128xf32>
    %159 = arith.mulf %158, %146 : vector<1x128xf32>
    %160 = arith.addf %157, %159 : vector<1x128xf32>
    %c0_98 = arith.constant 0 : index
    %c0_99 = arith.constant 0 : index
    %161 = vector.load %arg8[%c0_98, %c0_99] : memref<8x128xf32, #tpu.memory_space<vmem>>, vector<1x128xf32>
    tpu.vector_store %arg8[%c0_98, %c0_99], %160 {strides = array<i32>} : memref<8x128xf32, #tpu.memory_space<vmem>>, vector<1x128xf32>,
    %c0_100 = arith.constant 0 : index
    %c0_101 = arith.constant 0 : index
    %162 = vector.load %arg9[%c0_100, %c0_101] : memref<8x128xf32, #tpu.memory_space<vmem>>, vector<1x128xf32>
    %163 = vector.broadcast %105 : f32 to vector<1x128xf32>
    %164 = arith.mulf %163, %150 : vector<1x128xf32>
    %165 = arith.addf %162, %164 : vector<1x128xf32>
    %c0_102 = arith.constant 0 : index
    %c0_103 = arith.constant 0 : index
    %166 = vector.load %arg9[%c0_102, %c0_103] : memref<8x128xf32, #tpu.memory_space<vmem>>, vector<1x128xf32>
    tpu.vector_store %arg9[%c0_102, %c0_103], %165 {strides = array<i32>} : memref<8x128xf32, #tpu.memory_space<vmem>>, vector<1x128xf32>,
    return
  }
  func.func @transform_0(%arg0: i32, %arg1: i32) -> (i32, i32, i32) {
    %c1_i32 = arith.constant 1 : i32
    %0 = arith.muli %arg0, %c1_i32 : i32
    %1 = arith.addi %0, %arg1 : i32
    %c0_i32 = arith.constant 0 : i32
    %c0_i32_0 = arith.constant 0 : i32
    %c0_i32_1 = arith.constant 0 : i32
    return %1, %c0_i32, %c0_i32_0 : i32, i32, i32
  }
  func.func @transform_1(%arg0: i32, %arg1: i32) -> (i32, i32) {
    %c0_i32 = arith.constant 0 : i32
    %c0_i32_0 = arith.constant 0 : i32
    %c0_i32_1 = arith.constant 0 : i32
    return %c0_i32, %c0_i32_0 : i32, i32
  }
  func.func @transform_2(%arg0: i32, %arg1: i32) -> (i32, i32, i32) {
    %c0_i32 = arith.constant 0 : i32
    %c0_i32_0 = arith.constant 0 : i32
    %c0_i32_1 = arith.constant 0 : i32
    %c0_i32_2 = arith.constant 0 : i32
    return %c0_i32, %c0_i32_0, %c0_i32_1 : i32, i32, i32
  }
  func.func @transform_3(%arg0: i32, %arg1: i32) -> (i32, i32, i32) {
    %c0_i32 = arith.constant 0 : i32
    %c0_i32_0 = arith.constant 0 : i32
    %c0_i32_1 = arith.constant 0 : i32
    %c0_i32_2 = arith.constant 0 : i32
    return %c0_i32, %c0_i32_0, %c0_i32_1 : i32, i32, i32
  }
  func.func @transform_4(%arg0: i32, %arg1: i32) -> (i32, i32) {
    %c0_i32 = arith.constant 0 : i32
    %c0_i32_0 = arith.constant 0 : i32
    %c0_i32_1 = arith.constant 0 : i32
    return %c0_i32, %c0_i32_0 : i32, i32
  }
  func.func @transform_5(%arg0: i32, %arg1: i32) -> (i32, i32, i32) {
    %c1_i32 = arith.constant 1 : i32
    %0 = arith.muli %arg0, %c1_i32 : i32
    %1 = arith.addi %0, %arg1 : i32
    %c0_i32 = arith.constant 0 : i32
    %c0_i32_0 = arith.constant 0 : i32
    %c0_i32_1 = arith.constant 0 : i32
    return %1, %c0_i32, %c0_i32_0 : i32, i32, i32
  }
  func.func @transform_6(%arg0: i32, %arg1: i32) -> (i32, i32) {
    %c0_i32 = arith.constant 0 : i32
    %c0_i32_0 = arith.constant 0 : i32
    return %arg0, %c0_i32 : i32, i32
  }
  func.func @transform_7(%arg0: i32, %arg1: i32) -> (i32, i32) {
    %c0_i32 = arith.constant 0 : i32
    %c0_i32_0 = arith.constant 0 : i32
    return %arg0, %c0_i32 : i32, i32
  }
}

</mosaic_0001>

<llo_original>
// kernel: discriminator_forward.3
$region0: #{discriminator_forward.3}
  #allocation0 [shape = 'u32[]', space=smem, size = 0x4, offset = 0x4, fixed_abs, tag = 'smem constant byte address 0x4 - core index']
  #allocation1 [shape = 'u32[144,128]{1,0:T(1,128)}', space=vmem, size = 0x12000, scoped, tag = 'internal scratch']
  #allocation2 [shape = 'f32[1,1]{1,0:T(1,128)S(1)}', space=vmem, size = 0x200, scoped, tag = 'scoped memory for discriminator_forward.3']
  %s0 = inlined_call_operand.vmem [shape: bf16[2,20,128], index: 0, kind: input, shape index: {}]
  %s1 = inlined_call_operand.vmem [shape: f32[8,128], index: 1, kind: input, shape index: {}]
  %s2 = inlined_call_operand.vmem [shape: f32[8,128], index: 2, kind: input, shape index: {}]
  %s3 = inlined_call_operand.vmem [shape: f32[1,128], index: 3, kind: input, shape index: {}]
  %s4 = inlined_call_operand.vmem [shape: f32[1,128], index: 4, kind: input, shape index: {}]
  %s5 = inlined_call_operand.vmem [shape: f32[1,128], index: 5, kind: input, shape index: {}]
  %s6 = inlined_call_operand.vmem [shape: f32[20,128], index: 6, kind: input, shape index: {}]
  %s7 = inlined_call_operand.<no memory space> [shape: f32[1,1], index: 7, kind: input, shape index: {}]
  %s8 = inlined_call_operand.vmem [shape: f32[2,1], index: 8, kind: output, shape index: {}]
  %s9 = sld [smem:[#allocation0]]
  $region42: #{discriminator_forward.3} parent=0
    _
  %s11 = ssub.s32 1, %s9
  %s12 = scalar_select 0, %s11, %s9
  %v13 = vstv %s7
  %14 = vst [vmem:[#allocation2] sm:$0x1] %v13
  // Predicated region
  $region2: #{discriminator_forward.3} parent=0 // pred_check
    _
  $region3: #{discriminator_forward.3} parent=0 // pred_check_branch
    %16 = sbr.rel (0) target = $region5
  $region4: #{discriminator_forward.3} parent=0 // pred_region
    _
  $region5: #{discriminator_forward.3} parent=0 // pred_fallthru
    _
  // Predicated region
  $region6: #{discriminator_forward.3} parent=0 // pred_check
    _
  $region7: #{discriminator_forward.3} parent=0 // pred_check_branch
    %18 = sbr.rel (0) target = $region9
  $region8: #{discriminator_forward.3} parent=0 // pred_region
    _
  $region9: #{discriminator_forward.3} parent=0 // pred_fallthru
    _
  // Predicated region
  $region10: #{discriminator_forward.3} parent=0 // pred_check
    _
  $region11: #{discriminator_forward.3} parent=0 // pred_check_branch
    %20 = sbr.rel (0) target = $region13
  $region12: #{discriminator_forward.3} parent=0 // pred_region
    _
  $region13: #{discriminator_forward.3} parent=0 // pred_fallthru
    _
  // Predicated region
  $region14: #{discriminator_forward.3} parent=0 // pred_check
    _
  $region15: #{discriminator_forward.3} parent=0 // pred_check_branch
    %22 = sbr.rel (0) target = $region17
  $region16: #{discriminator_forward.3} parent=0 // pred_region
    _
  $region17: #{discriminator_forward.3} parent=0 // pred_fallthru
    _
  // Predicated region
  $region18: #{discriminator_forward.3} parent=0 // pred_check
    _
  $region19: #{discriminator_forward.3} parent=0 // pred_check_branch
    %24 = sbr.rel (0) target = $region21
  $region20: #{discriminator_forward.3} parent=0 // pred_region
    _
  $region21: #{discriminator_forward.3} parent=0 // pred_fallthru
    _
  // Predicated region
  $region22: #{discriminator_forward.3} parent=0 // pred_check
    _
  $region23: #{discriminator_forward.3} parent=0 // pred_check_branch
    %26 = sbr.rel (0) target = $region25
  $region24: #{discriminator_forward.3} parent=0 // pred_region
    _
  $region25: #{discriminator_forward.3} parent=0 // pred_fallthru
    _
  // Predicated region
  $region26: #{discriminator_forward.3} parent=0 // pred_check
    _
  $region27: #{discriminator_forward.3} parent=0 // pred_check_branch
    %28 = sbr.rel (0) target = $region29
  $region28: #{discriminator_forward.3} parent=0 // pred_region
    _
  $region29: #{discriminator_forward.3} parent=0 // pred_fallthru
    _
  // Predicated region
  $region30: #{discriminator_forward.3} parent=0 // pred_check
    _
  $region31: #{discriminator_forward.3} parent=0 // pred_check_branch
    %30 = sbr.rel (0) target = $region33
  $region32: #{discriminator_forward.3} parent=0 // pred_region
    _
  $region33: #{discriminator_forward.3} parent=0 // pred_fallthru
    _
  %v31 = vld [vmem:[%s1] sm:$0xff]
  %v32 = vrot.slane %v31, 4
  %v33 = vadd.f32 %v31, %v32
  %v34 = vrot.slane %v33, 2
  %v35 = vadd.f32 %v33, %v34
  %v36 = vrot.slane %v35, 1
  %v37 = vadd.f32 %v35, %v36
  %v38 = vmul.f32 %v37, 0.03125
  %v39 = vld [vmem:[%s2] sm:$0xff]
  %v40 = vrot.slane %v39, 4
  %v41 = vadd.f32 %v39, %v40
  %v42 = vrot.slane %v41, 2
  %v43 = vadd.f32 %v41, %v42
  %v44 = vrot.slane %v43, 1
  %v45 = vadd.f32 %v43, %v44
  %v46 = vmul.f32 %v45, 0.03125
  %v47 = vmul.f32 %v38, %v38
  %v48 = vsub.f32 %v46, %v47
  %v49 = vld [vmem:[%s3] sm:$0x1]
  %v50 = vadd.f32 %v38, %v49
  %v51 = vld [vmem:[%s4] sm:$0x1]
  %v52 = vadd.f32 %v48, 1e-05
  %v53 = vrsqrt.pop %v52
  %v54 = vmul.f32 %v51, %v53
  %v55 = vld [vmem:[%s5] sm:$0x1]
  %v56 = vmul.f32 %v50, %v54
  %v57 = vsub.f32 %v55, %v56
  %v58 = vld [vmem:[%s0] sm:$0xf]
  %v59 = vld [vmem:[%s0 + $0x4] sm:$0xf]
  %v60 = vld [vmem:[%s0 + $0x8] sm:$0x3]
  %v61 = vld [vmem:[%s0 + $0xc] sm:$0xf]
  %v62 = vld [vmem:[%s0 + $0x10] sm:$0xf]
  %v63 = vld [vmem:[%s0 + $0x14] sm:$0x3]
  %v64 = vunpack.c.l.bf16 %v58
  %v65 = vunpack.c.l.bf16 %v59
  %v66 = vunpack.c.l.bf16 %v60
  %v67 = vunpack.c.l.bf16 %v61
  %v68 = vunpack.c.l.bf16 %v62
  %v69 = vunpack.c.l.bf16 %v63
  %v71 = vlaneseq
  %v72 = vshrl.u32 %v71, 7
  %v73 = vsub.s32 0, %v72
  %v74 = vrot.slane %v54, %v73
  %v76 = vmul.f32 %v64, %v74
  %v77 = vmul.f32 %v65, %v74
  %v78 = vmul.f32 %v66, %v74
  %v79 = vmul.f32 %v67, %v74
  %v80 = vmul.f32 %v68, %v74
  %v81 = vmul.f32 %v69, %v74
  %v83 = vlaneseq
  %v84 = vshrl.u32 %v83, 7
  %v85 = vsub.s32 0, %v84
  %v86 = vrot.slane %v57, %v85
  %v88 = vadd.f32 %v76, %v86
  %v89 = vadd.f32 %v77, %v86
  %v90 = vadd.f32 %v78, %v86
  %v91 = vadd.f32 %v79, %v86
  %v92 = vadd.f32 %v80, %v86
  %v93 = vadd.f32 %v81, %v86
  %vm94 = vcmp.gt.f32.partialorder %v88, 0.0
  %vm95 = vcmp.gt.f32.partialorder %v89, 0.0
  %vm96 = vcmp.gt.f32.partialorder %v90, 0.0
  %vm97 = vcmp.gt.f32.partialorder %v91, 0.0
  %vm98 = vcmp.gt.f32.partialorder %v92, 0.0
  %vm99 = vcmp.gt.f32.partialorder %v93, 0.0
  %v100 = vmul.f32 %v88, 0.2
  %v101 = vmul.f32 %v89, 0.2
  %v102 = vmul.f32 %v90, 0.2
  %v103 = vmul.f32 %v91, 0.2
  %v104 = vmul.f32 %v92, 0.2
  %v105 = vmul.f32 %v93, 0.2
  %v106 = vsel %vm94, %v88, %v100
  %v107 = vsel %vm95, %v89, %v101
  %v108 = vsel %vm96, %v90, %v102
  %v109 = vsel %vm97, %v91, %v103
  %v110 = vsel %vm98, %v92, %v104
  %v111 = vsel %vm99, %v93, %v105
  %v112 = vld [vmem:[%s6] sm:$0xff]
  %v113 = vld [vmem:[%s6 + $0x8] sm:$0xff]
  %v114 = vld [vmem:[%s6 + $0x10] sm:$0xf]
  %v115 = vmul.f32 %v106, %v112
  %v116 = vmul.f32 %v107, %v113
  %v117 = vmul.f32 %v108, %v114
  %v118 = vmul.f32 %v109, %v112
  %v119 = vmul.f32 %v110, %v113
  %v120 = vmul.f32 %v111, %v114
  %121 = vadd.xlane.f32.xlu0 %v115
  %v122 = vpop.xlane.xlu0 %121
  %123 = vadd.xlane.f32.xlu0 %v116
  %v124 = vpop.xlane.xlu0 %123
  %vm125 = vcmask 1043456
  %v126 = vsel %vm125, %v117, 0.0
  %127 = vadd.xlane.f32.xlu0 %v126
  %v128 = vpop.xlane.xlu0 %127
  %129 = vadd.xlane.f32.xlu0 %v118
  %v130 = vpop.xlane.xlu0 %129
  %131 = vadd.xlane.f32.xlu0 %v119
  %v132 = vpop.xlane.xlu0 %131
  %v133 = vsel %vm125, %v120, 0.0
  %134 = vadd.xlane.f32.xlu0 %v133
  %v135 = vpop.xlane.xlu0 %134
  %v142 = vlaneseq
  %v143 = vand.u32 %v142, 127
  %v144 = vlaneseq
  %v145 = vshrl.u32 %v144, 7
  %v146 = vsub.s32 %v143, %v145
  %v147 = vrot.slane %v122, %v146
  %v148 = vadd.s32 %v143, 4294967288
  %v149 = vlaneseq
  %v150 = vshrl.u32 %v149, 7
  %v151 = vsub.s32 %v148, %v150
  %v152 = vrot.slane %v124, %v151
  %vm153 = vcmask 130112
  %v154 = vsel %vm153, %v152, %v147
  %v155 = vadd.s32 %v143, 4294967280
  %v156 = vlaneseq
  %v157 = vshrl.u32 %v156, 7
  %v158 = vsub.s32 %v155, %v157
  %v159 = vrot.slane %v128, %v158
  %vm160 = vcmask 195712
  %v161 = vsel %vm160, %v159, %v154
  %v162 = vlaneseq
  %v163 = vshrl.u32 %v162, 7
  %v164 = vsub.s32 %v143, %v163
  %v165 = vrot.slane %v130, %v164
  %v166 = vlaneseq
  %v167 = vshrl.u32 %v166, 7
  %v168 = vsub.s32 %v148, %v167
  %v169 = vrot.slane %v132, %v168
  %v170 = vsel %vm153, %v169, %v165
  %v171 = vlaneseq
  %v172 = vshrl.u32 %v171, 7
  %v173 = vsub.s32 %v155, %v172
  %v174 = vrot.slane %v135, %v173
  %v175 = vsel %vm160, %v174, %v170
  %vm176 = vcmask 1041409
  %v177 = vsel %vm176, %v175, %v161
  %vm179 = vcmask 156672
  %v180 = vsel %vm179, %v177, 0.0
  %181 = vadd.xlane.f32.xlu0 %v180
  %v182 = vpop.xlane.xlu0 %181
  %v183 = vld [vmem:[#allocation2] sm:$0x1]
  %v185 = vlaneseq
  %v186 = vshrl.u32 %v185, 7
  %v187 = vsub.s32 0, %v186
  %v188 = vrot.slane %v183, %v187
  %v190 = vadd.f32 %v182, %v188
  %v191 = vand.u32 2147483647, %v190
  %v192 = vsub.f32 0.0, %v191
  %v193 = vmul.f32 %v192, 1.442695
  %v194 = vpow.pop %v193
  %v195 = vadd.f32 %v194, 1.0
  %v196 = vrcp.pop %v195
  %v197 = vmul.f32 1.0, %v196
  %vm198 = vcmp.ge.f32.partialorder %v190, 0.0
  %v199 = vsub.f32 1.0, %v197
  %v200 = vsel %vm198, %v197, %v199
  %vm201 = vcmask 1024
  %202 = vst.msk [vmem:[%s8] sm:$0x3] %vm201, %v200
  // Predicated region
  $region34: #{discriminator_forward.3} parent=0 // pred_check
    _
  $region35: #{discriminator_forward.3} parent=0 // pred_check_branch
    %204 = sbr.rel (0) target = $region37
  $region36: #{discriminator_forward.3} parent=0 // pred_region
    _
  $region37: #{discriminator_forward.3} parent=0 // pred_fallthru
    _
  // Predicated region
  $region38: #{discriminator_forward.3} parent=0 // pred_check
    _
  $region39: #{discriminator_forward.3} parent=0 // pred_check_branch
    %206 = sbr.rel (0) target = $region41
  $region40: #{discriminator_forward.3} parent=0 // pred_region
    _
  $region41: #{discriminator_forward.3} parent=0 // pred_fallthru
    _

// kernel: discriminator_forward.2
$region0: #{discriminator_forward.2}
  #allocation0 [shape = 'u32[]', space=smem, size = 0x4, offset = 0x4, fixed_abs, tag = 'smem constant byte address 0x4 - core index']
  #allocation1 [shape = 'u32[144,128]{1,0:T(1,128)}', space=vmem, size = 0x12000, scoped, tag = 'internal scratch']
  #allocation2 [shape = 'bf16[30,256]{1,0:T(8,128)(2,1)}', space=vmem, size = 0x4000, scoped, tag = 'scratch operand']
  %s0 = inlined_call_operand.vmem [shape: bf16[2,30,112], index: 0, kind: input, shape index: {}]
  %s1 = inlined_call_operand.vmem [shape: bf16[112,256], index: 1, kind: input, shape index: {}]
  %s2 = inlined_call_operand.vmem [shape: bf16[2,256,128], index: 2, kind: input, shape index: {}]
  %s3 = inlined_call_operand.vmem [shape: bf16[2,128,128], index: 3, kind: input, shape index: {}]
  %s4 = inlined_call_operand.vmem [shape: f32[1,128], index: 4, kind: input, shape index: {}]
  %s5 = inlined_call_operand.vmem [shape: bf16[2,20,128], index: 5, kind: output, shape index: {0}]
  %s6 = inlined_call_operand.vmem [shape: f32[8,128], index: 6, kind: output, shape index: {1}]
  %s7 = inlined_call_operand.vmem [shape: f32[8,128], index: 7, kind: output, shape index: {2}]
  %8 = xla_tuple %s5, %s6, %s7
  %s9 = sld [smem:[#allocation0]]
  $region50: #{discriminator_forward.2} parent=0
    _
  %s11 = ssub.s32 1, %s9
  %s12 = scalar_select 0, %s11, %s9
  // Predicated region
  $region2: #{discriminator_forward.2} parent=0 // pred_check
    _
  $region3: #{discriminator_forward.2} parent=0 // pred_check_branch
    %14 = sbr.rel (0) target = $region5
  $region4: #{discriminator_forward.2} parent=0 // pred_region
    %s15 = sadd.s32 0, 0
    %s16 = smul.u32 2, %s15
    %p17 = scmp.lt.s32.totalorder %s16, 1
    %s18 = scalar_select %p17, %s16, 1
    %s19 = smul.addr %s18, 4
    %s20 = smul.addr %s19, 4
    %s21 = scalar_lea.vmem %s0, %s20
    %s22 = sadd.s32 0, 0
    %s23 = smul.u32 2, %s22
  $region5: #{discriminator_forward.2} parent=0 // pred_fallthru
    _
  // Predicated region
  $region6: #{discriminator_forward.2} parent=0 // pred_check
    _
  $region7: #{discriminator_forward.2} parent=0 // pred_check_branch
    %25 = sbr.rel (0) target = $region9
  $region8: #{discriminator_forward.2} parent=0 // pred_region
    _
  $region9: #{discriminator_forward.2} parent=0 // pred_fallthru
    _
  // Predicated region
  $region10: #{discriminator_forward.2} parent=0 // pred_check
    _
  $region11: #{discriminator_forward.2} parent=0 // pred_check_branch
    %27 = sbr.rel (0) target = $region13
  $region12: #{discriminator_forward.2} parent=0 // pred_region
    _
  $region13: #{discriminator_forward.2} parent=0 // pred_fallthru
    _
  // Predicated region
  $region14: #{discriminator_forward.2} parent=0 // pred_check
    _
  $region15: #{discriminator_forward.2} parent=0 // pred_check_branch
    %29 = sbr.rel (0) target = $region17
  $region16: #{discriminator_forward.2} parent=0 // pred_region
    _
  $region17: #{discriminator_forward.2} parent=0 // pred_fallthru
    _
  // Predicated region
  $region18: #{discriminator_forward.2} parent=0 // pred_check
    _
  $region19: #{discriminator_forward.2} parent=0 // pred_check_branch
    %31 = sbr.rel (0) target = $region21
  $region20: #{discriminator_forward.2} parent=0 // pred_region
    _
  $region21: #{discriminator_forward.2} parent=0 // pred_fallthru
    _
  %s32 = sadd.s32 0, 0
  %s33 = smul.u32 2, %s32
  %p34 = scmp.lt.s32.totalorder %s33, 1
  %s35 = scalar_select %p34, %s33, 1
  %s36 = smul.addr %s35, 4
  %s37 = smul.addr %s36, 4
  %s38 = scalar_lea.vmem %s0, %s37
  %s39 = sadd.s32 0, 0
  %s40 = smul.u32 2, %s39
  %p41 = scmp.lt.s32.totalorder %s40, 1
  %s42 = scalar_select %p41, %s40, 1
  %s43 = smul.addr %s42, 3
  %s44 = smul.addr %s43, 4
  %s45 = scalar_lea.vmem %s5, %s44
  %s46 = sadd.s32 0, 0
  %s47 = smul.u32 2, %s46
  %p48 = scmp.lt.s32.totalorder %s47, 1
  %s49 = scalar_select %p48, %s47, 1
  %s50 = smul.addr %s49, 4
  %s51 = smul.addr %s50, 4
  %s52 = scalar_lea.vmem %s0, %s51
  %s53 = sadd.s32 0, 0
  %s54 = smul.u32 2, %s53
  %s55 = sadd.s32 0, 0
  %s56 = smul.u32 2, %s55
  %p57 = scmp.lt.s32.totalorder %s56, 1
  %s58 = scalar_select %p57, %s56, 1
  %s59 = smul.addr %s58, 3
  %s60 = smul.addr %s59, 4
  %s61 = scalar_lea.vmem %s5, %s60
  %s62 = sadd.s32 0, 0
  %s63 = smul.u32 2, %s62
  %p65 = scmp.eq.s32.totalorder 0, 0
  // Predicated region
  $region22: #{discriminator_forward.2} parent=0 // pred_check
    %p66 = pneg %p65
  $region23: #{discriminator_forward.2} parent=0 // pred_check_branch
    %68 = sbr.rel (%p66) target = $region25
  $region24: #{discriminator_forward.2} parent=0 // pred_region
    %69 = vst [vmem:[%s6] sm:$0xff] 0.0
    %70 = vst [vmem:[%s7] sm:$0xff] 0.0
  $region25: #{discriminator_forward.2} parent=0 // pred_fallthru
    _
  %v71 = vld [vmem:[%s4] sm:$0x1]
  %v72 = vld [vmem:[%s2] sm:$0xf]
  %v73 = vld [vmem:[%s2 + $0x4] sm:$0xf]
  %v74 = vld [vmem:[%s2 + $0x8] sm:$0xf]
  %v75 = vld [vmem:[%s2 + $0xc] sm:$0xf]
  %v76 = vld [vmem:[%s2 + $0x10] sm:$0xf]
  %v77 = vld [vmem:[%s2 + $0x14] sm:$0xf]
  %v78 = vld [vmem:[%s2 + $0x18] sm:$0xf]
  %v79 = vld [vmem:[%s2 + $0x1c] sm:$0xf]
  %v80 = vld [vmem:[%s2 + $0x20] sm:$0xf]
  %v81 = vld [vmem:[%s2 + $0x24] sm:$0xf]
  %v82 = vld [vmem:[%s2 + $0x28] sm:$0xf]
  %v83 = vld [vmem:[%s2 + $0x2c] sm:$0xf]
  %v84 = vld [vmem:[%s2 + $0x30] sm:$0xf]
  %v85 = vld [vmem:[%s2 + $0x34] sm:$0xf]
  %v86 = vld [vmem:[%s2 + $0x38] sm:$0xf]
  %v87 = vld [vmem:[%s2 + $0x3c] sm:$0xf]
  %v88 = vld [vmem:[%s2 + $0x40] sm:$0xf]
  %v89 = vld [vmem:[%s2 + $0x44] sm:$0xf]
  %v90 = vld [vmem:[%s2 + $0x48] sm:$0xf]
  %v91 = vld [vmem:[%s2 + $0x4c] sm:$0xf]
  %v92 = vld [vmem:[%s2 + $0x50] sm:$0xf]
  %v93 = vld [vmem:[%s2 + $0x54] sm:$0xf]
  %v94 = vld [vmem:[%s2 + $0x58] sm:$0xf]
  %v95 = vld [vmem:[%s2 + $0x5c] sm:$0xf]
  %v96 = vld [vmem:[%s2 + $0x60] sm:$0xf]
  %v97 = vld [vmem:[%s2 + $0x64] sm:$0xf]
  %v98 = vld [vmem:[%s2 + $0x68] sm:$0xf]
  %v99 = vld [vmem:[%s2 + $0x6c] sm:$0xf]
  %v100 = vld [vmem:[%s2 + $0x70] sm:$0xf]
  %v101 = vld [vmem:[%s2 + $0x74] sm:$0xf]
  %v102 = vld [vmem:[%s2 + $0x78] sm:$0xf]
  %v103 = vld [vmem:[%s2 + $0x7c] sm:$0xf]
  %s104 = scalar_lea.vmem %s2, 128
  %v105 = vld [vmem:[%s104] sm:$0xf]
  %v106 = vld [vmem:[%s104 + $0x4] sm:$0xf]
  %v107 = vld [vmem:[%s104 + $0x8] sm:$0xf]
  %v108 = vld [vmem:[%s104 + $0xc] sm:$0xf]
  %v109 = vld [vmem:[%s104 + $0x10] sm:$0xf]
  %v110 = vld [vmem:[%s104 + $0x14] sm:$0xf]
  %v111 = vld [vmem:[%s104 + $0x18] sm:$0xf]
  %v112 = vld [vmem:[%s104 + $0x1c] sm:$0xf]
  %v113 = vld [vmem:[%s104 + $0x20] sm:$0xf]
  %v114 = vld [vmem:[%s104 + $0x24] sm:$0xf]
  %v115 = vld [vmem:[%s104 + $0x28] sm:$0xf]
  %v116 = vld [vmem:[%s104 + $0x2c] sm:$0xf]
  %v117 = vld [vmem:[%s104 + $0x30] sm:$0xf]
  %v118 = vld [vmem:[%s104 + $0x34] sm:$0xf]
  %v119 = vld [vmem:[%s104 + $0x38] sm:$0xf]
  %v120 = vld [vmem:[%s104 + $0x3c] sm:$0xf]
  %v121 = vld [vmem:[%s104 + $0x40] sm:$0xf]
  %v122 = vld [vmem:[%s104 + $0x44] sm:$0xf]
  %v123 = vld [vmem:[%s104 + $0x48] sm:$0xf]
  %v124 = vld [vmem:[%s104 + $0x4c] sm:$0xf]
  %v125 = vld [vmem:[%s104 + $0x50] sm:$0xf]
  %v126 = vld [vmem:[%s104 + $0x54] sm:$0xf]
  %v127 = vld [vmem:[%s104 + $0x58] sm:$0xf]
  %v128 = vld [vmem:[%s104 + $0x5c] sm:$0xf]
  %v129 = vld [vmem:[%s104 + $0x60] sm:$0xf]
  %v130 = vld [vmem:[%s104 + $0x64] sm:$0xf]
  %v131 = vld [vmem:[%s104 + $0x68] sm:$0xf]
  %v132 = vld [vmem:[%s104 + $0x6c] sm:$0xf]
  %v133 = vld [vmem:[%s104 + $0x70] sm:$0xf]
  %v134 = vld [vmem:[%s104 + $0x74] sm:$0xf]
  %v135 = vld [vmem:[%s104 + $0x78] sm:$0xf]
  %v136 = vld [vmem:[%s104 + $0x7c] sm:$0xf]
  %v137 = vld [vmem:[%s3] sm:$0xf]
  %v138 = vld [vmem:[%s3 + $0x4] sm:$0xf]
  %v139 = vld [vmem:[%s3 + $0x8] sm:$0xf]
  %v140 = vld [vmem:[%s3 + $0xc] sm:$0xf]
  %v141 = vld [vmem:[%s3 + $0x10] sm:$0xf]
  %v142 = vld [vmem:[%s3 + $0x14] sm:$0xf]
  %v143 = vld [vmem:[%s3 + $0x18] sm:$0xf]
  %v144 = vld [vmem:[%s3 + $0x1c] sm:$0xf]
  %v145 = vld [vmem:[%s3 + $0x20] sm:$0xf]
  %v146 = vld [vmem:[%s3 + $0x24] sm:$0xf]
  %v147 = vld [vmem:[%s3 + $0x28] sm:$0xf]
  %v148 = vld [vmem:[%s3 + $0x2c] sm:$0xf]
  %v149 = vld [vmem:[%s3 + $0x30] sm:$0xf]
  %v150 = vld [vmem:[%s3 + $0x34] sm:$0xf]
  %v151 = vld [vmem:[%s3 + $0x38] sm:$0xf]
  %v152 = vld [vmem:[%s3 + $0x3c] sm:$0xf]
  %s153 = scalar_lea.vmem %s3, 64
  %v154 = vld [vmem:[%s153] sm:$0xf]
  %v155 = vld [vmem:[%s153 + $0x4] sm:$0xf]
  %v156 = vld [vmem:[%s153 + $0x8] sm:$0xf]
  %v157 = vld [vmem:[%s153 + $0xc] sm:$0xf]
  %v158 = vld [vmem:[%s153 + $0x10] sm:$0xf]
  %v159 = vld [vmem:[%s153 + $0x14] sm:$0xf]
  %v160 = vld [vmem:[%s153 + $0x18] sm:$0xf]
  %v161 = vld [vmem:[%s153 + $0x1c] sm:$0xf]
  %v162 = vld [vmem:[%s153 + $0x20] sm:$0xf]
  %v163 = vld [vmem:[%s153 + $0x24] sm:$0xf]
  %v164 = vld [vmem:[%s153 + $0x28] sm:$0xf]
  %v165 = vld [vmem:[%s153 + $0x2c] sm:$0xf]
  %v166 = vld [vmem:[%s153 + $0x30] sm:$0xf]
  %v167 = vld [vmem:[%s153 + $0x34] sm:$0xf]
  %v168 = vld [vmem:[%s153 + $0x38] sm:$0xf]
  %v169 = vld [vmem:[%s153 + $0x3c] sm:$0xf]
  %s170 = sadd.s32 0, 0
  %s171 = smul.u32 %s170, 2
  %v172 = vld [vmem:[%s52] sm:$0xf]
  %v173 = vld [vmem:[%s52 + $0x4] sm:$0xf]
  %v174 = vld [vmem:[%s52 + $0x8] sm:$0xf]
  %v175 = vld [vmem:[%s52 + $0xc] sm:$0x7]
  %v176 = vld [vmem:[%s1] sm:$0xff]
  %v177 = vld [vmem:[%s1 + $0x8] sm:$0xff]
  %v178 = vld [vmem:[%s1 + $0x10] sm:$0xff]
  %v179 = vld [vmem:[%s1 + $0x18] sm:$0xff]
  %v180 = vld [vmem:[%s1 + $0x20] sm:$0xff]
  %v181 = vld [vmem:[%s1 + $0x28] sm:$0xff]
  %v182 = vld [vmem:[%s1 + $0x30] sm:$0xff]
  %v183 = vld [vmem:[%s1 + $0x38] sm:$0xff]
  %v184 = vld [vmem:[%s1 + $0x40] sm:$0xff]
  %v185 = vld [vmem:[%s1 + $0x48] sm:$0xff]
  %v186 = vld [vmem:[%s1 + $0x50] sm:$0xff]
  %v187 = vld [vmem:[%s1 + $0x58] sm:$0xff]
  %v188 = vld [vmem:[%s1 + $0x60] sm:$0xff]
  %v189 = vld [vmem:[%s1 + $0x68] sm:$0xff]
  %v194 = vunpack.c.l.b16 %v172
  %v195 = vunpack.c.l.b16 %v173
  %v196 = vunpack.c.l.b16 %v174
  %v197 = vunpack.c.l.b16 %v175
  %v198 = vpack.c.b16 %v195, %v194
  %v199 = vpack.c.b16 %v197, %v196
  %v214 = vunpack.c.l.b16 %v176
  %v215 = vunpack.c.h.b16 %v176
  %v216 = vunpack.c.l.b16 %v177
  %v217 = vunpack.c.h.b16 %v177
  %v218 = vunpack.c.l.b16 %v178
  %v219 = vunpack.c.h.b16 %v178
  %v220 = vunpack.c.l.b16 %v179
  %v221 = vunpack.c.h.b16 %v179
  %v222 = vunpack.c.l.b16 %v180
  %v223 = vunpack.c.h.b16 %v180
  %v224 = vunpack.c.l.b16 %v181
  %v225 = vunpack.c.h.b16 %v181
  %v226 = vunpack.c.l.b16 %v182
  %v227 = vunpack.c.h.b16 %v182
  %v228 = vunpack.c.l.b16 %v183
  %v229 = vunpack.c.h.b16 %v183
  %v230 = vunpack.c.l.b16 %v184
  %v231 = vunpack.c.h.b16 %v184
  %v232 = vunpack.c.l.b16 %v185
  %v233 = vunpack.c.h.b16 %v185
  %v234 = vunpack.c.l.b16 %v186
  %v235 = vunpack.c.h.b16 %v186
  %v236 = vunpack.c.l.b16 %v187
  %v237 = vunpack.c.h.b16 %v187
  %v238 = vunpack.c.l.b16 %v188
  %v239 = vunpack.c.h.b16 %v188
  %v240 = vunpack.c.l.b16 %v189
  %v241 = vunpack.c.h.b16 %v189
  %v242 = vpack.c.b16 %v216, %v214
  %v243 = vpack.c.b16 %v217, %v215
  %v244 = vpack.c.b16 %v220, %v218
  %v245 = vpack.c.b16 %v221, %v219
  %v246 = vpack.c.b16 %v224, %v222
  %v247 = vpack.c.b16 %v225, %v223
  %v248 = vpack.c.b16 %v228, %v226
  %v249 = vpack.c.b16 %v229, %v227
  %v250 = vpack.c.b16 %v232, %v230
  %v251 = vpack.c.b16 %v233, %v231
  %v252 = vpack.c.b16 %v236, %v234
  %v253 = vpack.c.b16 %v237, %v235
  %v254 = vpack.c.b16 %v240, %v238
  %v255 = vpack.c.b16 %v241, %v239
  %vm270 = vcmask 916480
  %v272 = vsel %vm270, %v198, 0
  %v275 = vsel %vm270, %v199, 0
  %277 = vmatprep.subr.bf16.mxu0 0
  %278 = vmatpush1.bf16.msra.mxu0 0
  %279 = vmatprep.subr.bf16.mxu0 %v255
  %280 = vmatpush1.bf16.msra.mxu0 %v254
  %281 = vmatprep.subr.bf16.mxu0 %v253
  %282 = vmatpush1.bf16.msra.mxu0 %v252
  %283 = vmatprep.subr.bf16.mxu0 %v251
  %284 = vmatpush1.bf16.msra.mxu0 %v250
  %285 = vmatprep.subr.bf16.mxu0 %v249
  %286 = vmatpush1.bf16.msra.mxu0 %v248
  %287 = vmatprep.subr.bf16.mxu0 %v247
  %288 = vmatpush1.bf16.msra.mxu0 %v246
  %289 = vmatprep.subr.bf16.mxu0 %v245
  %290 = vmatpush1.bf16.msra.mxu0 %v244
  %291 = vmatprep.subr.bf16.mxu0 %v243
  %292 = vmatpush1.bf16.msra.mxu0 %v242
  %293 = vmatprep.subr.bf16.mxu0 0
  %294 = vmatpush2.bf16.msra.mxu0 0
  %295 = vmatprep.subr.bf16.mxu0 0
  %296 = vmatpush2.bf16.msra.mxu0 0
  %297 = vmatprep.subr.bf16.mxu0 0
  %298 = vmatpush2.bf16.msra.mxu0 0
  %299 = vmatprep.subr.bf16.mxu0 0
  %300 = vmatpush2.bf16.msra.mxu0 0
  %301 = vmatprep.subr.bf16.mxu0 0
  %302 = vmatpush2.bf16.msra.mxu0 0
  %303 = vmatprep.subr.bf16.mxu0 0
  %304 = vmatpush2.bf16.msra.mxu0 0
  %305 = vmatprep.subr.bf16.mxu0 0
  %306 = vmatpush2.bf16.msra.mxu0 0
  %307 = vmatprep.subr.bf16.mxu0 0
  %308 = vmatpush2.bf16.msra.mxu0 0
  %309 = vmatprep.mubr.bf16.mxu0 0
  %310 = vmatmul.mubr.bf16.gmra.mxu0 %v272
  %v311 = vpop.f32.mrf.mxu0
  %v312 = vadd.f32 0.0, %v311
  %v313 = vpop.f32.mrf.mxu0
  %v314 = vadd.f32 0.0, %v313
  %v315 = vpop.f32.mrf.mxu0
  %v316 = vadd.f32 0.0, %v315
  %v317 = vpop.f32.mrf.mxu0
  %v318 = vadd.f32 0.0, %v317
  %319 = vmatprep.mubr.bf16.mxu0 0
  %320 = vmatmul.mubr.bf16.gmra.mxu0 %v275
  %v321 = vpop.f32.mrf.mxu0
  %v322 = vadd.f32 0.0, %v321
  %v323 = vpop.f32.mrf.mxu0
  %v324 = vadd.f32 0.0, %v323
  %v325 = vpop.f32.mrf.mxu0
  %v326 = vadd.f32 0.0, %v325
  %v327 = vpop.f32.mrf.mxu0
  %v328 = vadd.f32 0.0, %v327
  %329 = vdwg.mxu0
  %vm330 = vcmp.gt.f32.partialorder %v312, 0.0
  %vm331 = vcmp.gt.f32.partialorder %v314, 0.0
  %vm332 = vcmp.gt.f32.partialorder %v316, 0.0
  %vm333 = vcmp.gt.f32.partialorder %v318, 0.0
  %vm334 = vcmp.gt.f32.partialorder %v322, 0.0
  %vm335 = vcmp.gt.f32.partialorder %v324, 0.0
  %vm336 = vcmp.gt.f32.partialorder %v326, 0.0
  %vm337 = vcmp.gt.f32.partialorder %v328, 0.0
  %v338 = vmul.f32 %v312, 0.2
  %v339 = vmul.f32 %v314, 0.2
  %v340 = vmul.f32 %v316, 0.2
  %v341 = vmul.f32 %v318, 0.2
  %v342 = vmul.f32 %v322, 0.2
  %v343 = vmul.f32 %v324, 0.2
  %v344 = vmul.f32 %v326, 0.2
  %v345 = vmul.f32 %v328, 0.2
  %v346 = vsel %vm330, %v312, %v338
  %v347 = vsel %vm331, %v314, %v339
  %v348 = vsel %vm332, %v316, %v340
  %v349 = vsel %vm333, %v318, %v341
  %v350 = vsel %vm334, %v322, %v342
  %v351 = vsel %vm335, %v324, %v343
  %v352 = vsel %vm336, %v326, %v344
  %v353 = vsel %vm337, %v328, %v345
  %v354 = vpack.c.bf16 %v348, %v346
  %v355 = vpack.c.bf16 %v349, %v347
  %v356 = vpack.c.bf16 %v352, %v350
  %v357 = vpack.c.bf16 %v353, %v351
  %v362 = vunpack.c.l.b16 %v354
  %v363 = vunpack.c.l.b16 %v355
  %v364 = vunpack.c.h.b16 %v354
  %v365 = vunpack.c.h.b16 %v355
  %v366 = vunpack.c.l.b16 %v356
  %v367 = vunpack.c.l.b16 %v357
  %v368 = vunpack.c.h.b16 %v356
  %v369 = vunpack.c.h.b16 %v357
  %v370 = vpack.c.b16 %v363, %v362
  %v371 = vpack.c.b16 %v365, %v364
  %v372 = vpack.c.b16 %v367, %v366
  %v373 = vpack.c.b16 %v369, %v368
  %378 = vst [vmem:[#allocation2] sm:$0xff] %v370
  %379 = vst [vmem:[#allocation2 + $0x8] sm:$0xff] %v371
  %380 = vst [vmem:[#allocation2 + $0x10] sm:$0xff] %v372
  %381 = vst [vmem:[#allocation2 + $0x18] sm:$0x77] %v373
  %p382 = scmp.lt.s32.totalorder %s171, 2
  %s383 = scalar_select %p382, 1, 0
  %s384 = scvt.s32.f32 %s383
  %v385 = vld [vmem:[#allocation2] sm:$0xff]
  %v386 = vld [vmem:[#allocation2 + $0x8] sm:$0xff]
  %v387 = vld [vmem:[#allocation2 + $0x10] sm:$0x33]
  %v388 = vld [vmem:[#allocation2] sm:$0xf]
  %v389 = vld [vmem:[#allocation2 + $0x8] sm:$0xf]
  %v390 = vld [vmem:[#allocation2 + $0x10] sm:$0x7]
  %v394 = vunpack.c.l.b16 %v388
  %v395 = vunpack.c.l.b16 %v389
  %v396 = vunpack.c.l.b16 %v390
  %v397 = vpack.c.b16 %v395, %v394
  %v398 = vpack.c.b16 %v396, %v396
  %vm399 = vsmask.f32 7424
  %v401 = vshrl.u32 %v397, 16
  %v403 = vshll.u32 %v397, 16
  %v405 = vrot.slane %v403, 1
  %v406 = vor.u32 %v401, %v405
  %v408 = vshll.u32 %v398, 16
  %v410 = vrot.slane %v408, 1
  %v411 = vsel %vm399, %v406, %v410
  %v412 = vshrl.u32 %v398, 16
  %v414 = vor.u32 %v412, %v410
  %v433 = vunpack.c.l.b16 %v137
  %v434 = vunpack.c.l.b16 %v138
  %v435 = vunpack.c.l.b16 %v139
  %v436 = vunpack.c.l.b16 %v140
  %v437 = vunpack.c.l.b16 %v141
  %v438 = vunpack.c.l.b16 %v142
  %v439 = vunpack.c.l.b16 %v143
  %v440 = vunpack.c.l.b16 %v144
  %v441 = vunpack.c.l.b16 %v145
  %v442 = vunpack.c.l.b16 %v146
  %v443 = vunpack.c.l.b16 %v147
  %v444 = vunpack.c.l.b16 %v148
  %v445 = vunpack.c.l.b16 %v149
  %v446 = vunpack.c.l.b16 %v150
  %v447 = vunpack.c.l.b16 %v151
  %v448 = vunpack.c.l.b16 %v152
  %v449 = vpack.c.b16 %v434, %v433
  %v450 = vpack.c.b16 %v436, %v435
  %v451 = vpack.c.b16 %v438, %v437
  %v452 = vpack.c.b16 %v440, %v439
  %v453 = vpack.c.b16 %v442, %v441
  %v454 = vpack.c.b16 %v444, %v443
  %v455 = vpack.c.b16 %v446, %v445
  %v456 = vpack.c.b16 %v448, %v447
  %465 = vmatprep.subr.bf16.mxu0 0
  %466 = vmatpush1.bf16.msra.mxu0 %v456
  %467 = vmatprep.subr.bf16.mxu0 0
  %468 = vmatpush1.bf16.msra.mxu0 %v455
  %469 = vmatprep.subr.bf16.mxu0 0
  %470 = vmatpush1.bf16.msra.mxu0 %v454
  %471 = vmatprep.subr.bf16.mxu0 0
  %472 = vmatpush1.bf16.msra.mxu0 %v453
  %473 = vmatprep.subr.bf16.mxu0 0
  %474 = vmatpush1.bf16.msra.mxu0 %v452
  %475 = vmatprep.subr.bf16.mxu0 0
  %476 = vmatpush1.bf16.msra.mxu0 %v451
  %477 = vmatprep.subr.bf16.mxu0 0
  %478 = vmatpush1.bf16.msra.mxu0 %v450
  %479 = vmatprep.subr.bf16.mxu0 0
  %480 = vmatpush1.bf16.msra.mxu0 %v449
  %481 = vmatprep.subr.bf16.mxu0 0
  %482 = vmatpush2.bf16.msra.mxu0 0
  %483 = vmatprep.subr.bf16.mxu0 0
  %484 = vmatpush2.bf16.msra.mxu0 0
  %485 = vmatprep.subr.bf16.mxu0 0
  %486 = vmatpush2.bf16.msra.mxu0 0
  %487 = vmatprep.subr.bf16.mxu0 0
  %488 = vmatpush2.bf16.msra.mxu0 0
  %489 = vmatprep.subr.bf16.mxu0 0
  %490 = vmatpush2.bf16.msra.mxu0 0
  %491 = vmatprep.subr.bf16.mxu0 0
  %492 = vmatpush2.bf16.msra.mxu0 0
  %493 = vmatprep.subr.bf16.mxu0 0
  %494 = vmatpush2.bf16.msra.mxu0 0
  %495 = vmatprep.subr.bf16.mxu0 0
  %496 = vmatpush2.bf16.msra.mxu0 0
  %497 = vmatprep.mubr.bf16.mxu0 0
  %498 = vmatmul.mubr.bf16.gmra.mxu0 %v411
  %v499 = vpop.f32.mrf.mxu0
  %v500 = vadd.f32 0.0, %v499
  %v501 = vpop.f32.mrf.mxu0
  %v502 = vpop.f32.mrf.mxu0
  %v503 = vadd.f32 0.0, %v502
  %v504 = vpop.f32.mrf.mxu0
  %505 = vmatprep.mubr.bf16.mxu0 0
  %506 = vmatmul.mubr.bf16.gmra.mxu0 %v414
  %v507 = vpop.f32.mrf.mxu0
  %v508 = vadd.f32 0.0, %v507
  %v509 = vpop.f32.mrf.mxu0
  %v510 = vpop.f32.mrf.mxu0
  %v511 = vpop.f32.mrf.mxu0
  %512 = vdwg.mxu0
  %v516 = vunpack.c.l.b16 %v385
  %v517 = vunpack.c.h.b16 %v385
  %v518 = vunpack.c.l.b16 %v386
  %v519 = vunpack.c.h.b16 %v386
  %v520 = vunpack.c.l.b16 %v387
  %v521 = vunpack.c.h.b16 %v387
  %v522 = vpack.c.b16 %v518, %v516
  %v523 = vpack.c.b16 %v519, %v517
  %v524 = vpack.c.b16 %v520, %v520
  %v525 = vpack.c.b16 %v521, %v521
  %v562 = vunpack.c.l.b16 %v72
  %v563 = vunpack.c.l.b16 %v73
  %v564 = vunpack.c.l.b16 %v74
  %v565 = vunpack.c.l.b16 %v75
  %v566 = vunpack.c.l.b16 %v76
  %v567 = vunpack.c.l.b16 %v77
  %v568 = vunpack.c.l.b16 %v78
  %v569 = vunpack.c.l.b16 %v79
  %v570 = vunpack.c.l.b16 %v80
  %v571 = vunpack.c.l.b16 %v81
  %v572 = vunpack.c.l.b16 %v82
  %v573 = vunpack.c.l.b16 %v83
  %v574 = vunpack.c.l.b16 %v84
  %v575 = vunpack.c.l.b16 %v85
  %v576 = vunpack.c.l.b16 %v86
  %v577 = vunpack.c.l.b16 %v87
  %v578 = vunpack.c.l.b16 %v88
  %v579 = vunpack.c.l.b16 %v89
  %v580 = vunpack.c.l.b16 %v90
  %v581 = vunpack.c.l.b16 %v91
  %v582 = vunpack.c.l.b16 %v92
  %v583 = vunpack.c.l.b16 %v93
  %v584 = vunpack.c.l.b16 %v94
  %v585 = vunpack.c.l.b16 %v95
  %v586 = vunpack.c.l.b16 %v96
  %v587 = vunpack.c.l.b16 %v97
  %v588 = vunpack.c.l.b16 %v98
  %v589 = vunpack.c.l.b16 %v99
  %v590 = vunpack.c.l.b16 %v100
  %v591 = vunpack.c.l.b16 %v101
  %v592 = vunpack.c.l.b16 %v102
  %v593 = vunpack.c.l.b16 %v103
  %v594 = vpack.c.b16 %v563, %v562
  %v595 = vpack.c.b16 %v565, %v564
  %v596 = vpack.c.b16 %v567, %v566
  %v597 = vpack.c.b16 %v569, %v568
  %v598 = vpack.c.b16 %v571, %v570
  %v599 = vpack.c.b16 %v573, %v572
  %v600 = vpack.c.b16 %v575, %v574
  %v601 = vpack.c.b16 %v577, %v576
  %v602 = vpack.c.b16 %v579, %v578
  %v603 = vpack.c.b16 %v581, %v580
  %v604 = vpack.c.b16 %v583, %v582
  %v605 = vpack.c.b16 %v585, %v584
  %v606 = vpack.c.b16 %v587, %v586
  %v607 = vpack.c.b16 %v589, %v588
  %v608 = vpack.c.b16 %v591, %v590
  %v609 = vpack.c.b16 %v593, %v592
  %626 = vmatprep.subr.bf16.mxu0 0
  %627 = vmatpush1.bf16.msra.mxu0 %v601
  %628 = vmatprep.subr.bf16.mxu0 0
  %629 = vmatpush1.bf16.msra.mxu0 %v600
  %630 = vmatprep.subr.bf16.mxu0 0
  %631 = vmatpush1.bf16.msra.mxu0 %v599
  %632 = vmatprep.subr.bf16.mxu0 0
  %633 = vmatpush1.bf16.msra.mxu0 %v598
  %634 = vmatprep.subr.bf16.mxu0 0
  %635 = vmatpush1.bf16.msra.mxu0 %v597
  %636 = vmatprep.subr.bf16.mxu0 0
  %637 = vmatpush1.bf16.msra.mxu0 %v596
  %638 = vmatprep.subr.bf16.mxu0 0
  %639 = vmatpush1.bf16.msra.mxu0 %v595
  %640 = vmatprep.subr.bf16.mxu0 0
  %641 = vmatpush1.bf16.msra.mxu0 %v594
  %642 = vmatprep.subr.bf16.mxu0 0
  %643 = vmatpush2.bf16.msra.mxu0 %v609
  %644 = vmatprep.subr.bf16.mxu0 0
  %645 = vmatpush2.bf16.msra.mxu0 %v608
  %646 = vmatprep.subr.bf16.mxu0 0
  %647 = vmatpush2.bf16.msra.mxu0 %v607
  %648 = vmatprep.subr.bf16.mxu0 0
  %649 = vmatpush2.bf16.msra.mxu0 %v606
  %650 = vmatprep.subr.bf16.mxu0 0
  %651 = vmatpush2.bf16.msra.mxu0 %v605
  %652 = vmatprep.subr.bf16.mxu0 0
  %653 = vmatpush2.bf16.msra.mxu0 %v604
  %654 = vmatprep.subr.bf16.mxu0 0
  %655 = vmatpush2.bf16.msra.mxu0 %v603
  %656 = vmatprep.subr.bf16.mxu0 0
  %657 = vmatpush2.bf16.msra.mxu0 %v602
  %658 = vmatprep.mubr.bf16.mxu0 %v523
  %659 = vmatmul.mubr.bf16.gmra.mxu0 %v522
  %v660 = vpop.f32.mrf.mxu0
  %v661 = vadd.f32 %v500, %v660
  %v662 = vpop.f32.mrf.mxu0
  %v663 = vpop.f32.mrf.mxu0
  %v664 = vadd.f32 %v503, %v663
  %v665 = vpop.f32.mrf.mxu0
  %666 = vmatprep.mubr.bf16.mxu0 %v525
  %667 = vmatmul.mubr.bf16.gmra.mxu0 %v524
  %v668 = vpop.f32.mrf.mxu0
  %v669 = vadd.f32 %v508, %v668
  %v670 = vpop.f32.mrf.mxu0
  %v671 = vpop.f32.mrf.mxu0
  %v672 = vpop.f32.mrf.mxu0
  %673 = vdwg.mxu0
  %v674 = vld [vmem:[#allocation2] sm:$0xcc]
  %v675 = vld [vmem:[#allocation2 + $0x8] sm:$0xff]
  %v676 = vld [vmem:[#allocation2 + $0x10] sm:$0xff]
  %v677 = vld [vmem:[#allocation2 + $0x18] sm:$0x11]
  %v682 = vunpack.c.l.b16 %v674
  %v683 = vunpack.c.h.b16 %v674
  %v684 = vunpack.c.l.b16 %v675
  %v685 = vunpack.c.h.b16 %v675
  %v686 = vunpack.c.l.b16 %v676
  %v687 = vunpack.c.h.b16 %v676
  %v688 = vunpack.c.l.b16 %v677
  %v689 = vunpack.c.h.b16 %v677
  %v690 = vpack.c.b16 %v684, %v682
  %v691 = vpack.c.b16 %v685, %v683
  %v692 = vpack.c.b16 %v688, %v686
  %v693 = vpack.c.b16 %v689, %v687
  %vm694 = vsmask.f32 5376
  %v696 = vshrl.u32 %v690, 16
  %v698 = vrot.slane %v696, 2
  %v699 = vshll.u32 %v690, 16
  %v701 = vrot.slane %v699, 3
  %v702 = vor.u32 %v698, %v701
  %v704 = vshrl.u32 %v692, 16
  %v706 = vrot.slane %v704, 2
  %v707 = vshll.u32 %v692, 16
  %v709 = vrot.slane %v707, 3
  %v710 = vor.u32 %v706, %v709
  %v711 = vsel %vm694, %v702, %v710
  %v713 = vshrl.u32 %v691, 16
  %v715 = vrot.slane %v713, 2
  %v716 = vshll.u32 %v691, 16
  %v718 = vrot.slane %v716, 3
  %v719 = vor.u32 %v715, %v718
  %v721 = vshrl.u32 %v693, 16
  %v723 = vrot.slane %v721, 2
  %v724 = vshll.u32 %v693, 16
  %v726 = vrot.slane %v724, 3
  %v727 = vor.u32 %v723, %v726
  %v728 = vsel %vm694, %v719, %v727
  %v765 = vunpack.c.l.b16 %v105
  %v766 = vunpack.c.l.b16 %v106
  %v767 = vunpack.c.l.b16 %v107
  %v768 = vunpack.c.l.b16 %v108
  %v769 = vunpack.c.l.b16 %v109
  %v770 = vunpack.c.l.b16 %v110
  %v771 = vunpack.c.l.b16 %v111
  %v772 = vunpack.c.l.b16 %v112
  %v773 = vunpack.c.l.b16 %v113
  %v774 = vunpack.c.l.b16 %v114
  %v775 = vunpack.c.l.b16 %v115
  %v776 = vunpack.c.l.b16 %v116
  %v777 = vunpack.c.l.b16 %v117
  %v778 = vunpack.c.l.b16 %v118
  %v779 = vunpack.c.l.b16 %v119
  %v780 = vunpack.c.l.b16 %v120
  %v781 = vunpack.c.l.b16 %v121
  %v782 = vunpack.c.l.b16 %v122
  %v783 = vunpack.c.l.b16 %v123
  %v784 = vunpack.c.l.b16 %v124
  %v785 = vunpack.c.l.b16 %v125
  %v786 = vunpack.c.l.b16 %v126
  %v787 = vunpack.c.l.b16 %v127
  %v788 = vunpack.c.l.b16 %v128
  %v789 = vunpack.c.l.b16 %v129
  %v790 = vunpack.c.l.b16 %v130
  %v791 = vunpack.c.l.b16 %v131
  %v792 = vunpack.c.l.b16 %v132
  %v793 = vunpack.c.l.b16 %v133
  %v794 = vunpack.c.l.b16 %v134
  %v795 = vunpack.c.l.b16 %v135
  %v796 = vunpack.c.l.b16 %v136
  %v797 = vpack.c.b16 %v766, %v765
  %v798 = vpack.c.b16 %v768, %v767
  %v799 = vpack.c.b16 %v770, %v769
  %v800 = vpack.c.b16 %v772, %v771
  %v801 = vpack.c.b16 %v774, %v773
  %v802 = vpack.c.b16 %v776, %v775
  %v803 = vpack.c.b16 %v778, %v777
  %v804 = vpack.c.b16 %v780, %v779
  %v805 = vpack.c.b16 %v782, %v781
  %v806 = vpack.c.b16 %v784, %v783
  %v807 = vpack.c.b16 %v786, %v785
  %v808 = vpack.c.b16 %v788, %v787
  %v809 = vpack.c.b16 %v790, %v789
  %v810 = vpack.c.b16 %v792, %v791
  %v811 = vpack.c.b16 %v794, %v793
  %v812 = vpack.c.b16 %v796, %v795
  %829 = vmatprep.subr.bf16.mxu0 0
  %830 = vmatpush1.bf16.msra.mxu0 %v804
  %831 = vmatprep.subr.bf16.mxu0 0
  %832 = vmatpush1.bf16.msra.mxu0 %v803
  %833 = vmatprep.subr.bf16.mxu0 0
  %834 = vmatpush1.bf16.msra.mxu0 %v802
  %835 = vmatprep.subr.bf16.mxu0 0
  %836 = vmatpush1.bf16.msra.mxu0 %v801
  %837 = vmatprep.subr.bf16.mxu0 0
  %838 = vmatpush1.bf16.msra.mxu0 %v800
  %839 = vmatprep.subr.bf16.mxu0 0
  %840 = vmatpush1.bf16.msra.mxu0 %v799
  %841 = vmatprep.subr.bf16.mxu0 0
  %842 = vmatpush1.bf16.msra.mxu0 %v798
  %843 = vmatprep.subr.bf16.mxu0 0
  %844 = vmatpush1.bf16.msra.mxu0 %v797
  %845 = vmatprep.subr.bf16.mxu0 0
  %846 = vmatpush2.bf16.msra.mxu0 %v812
  %847 = vmatprep.subr.bf16.mxu0 0
  %848 = vmatpush2.bf16.msra.mxu0 %v811
  %849 = vmatprep.subr.bf16.mxu0 0
  %850 = vmatpush2.bf16.msra.mxu0 %v810
  %851 = vmatprep.subr.bf16.mxu0 0
  %852 = vmatpush2.bf16.msra.mxu0 %v809
  %853 = vmatprep.subr.bf16.mxu0 0
  %854 = vmatpush2.bf16.msra.mxu0 %v808
  %855 = vmatprep.subr.bf16.mxu0 0
  %856 = vmatpush2.bf16.msra.mxu0 %v807
  %857 = vmatprep.subr.bf16.mxu0 0
  %858 = vmatpush2.bf16.msra.mxu0 %v806
  %859 = vmatprep.subr.bf16.mxu0 0
  %860 = vmatpush2.bf16.msra.mxu0 %v805
  %861 = vmatprep.mubr.bf16.mxu0 %v728
  %862 = vmatmul.mubr.bf16.gmra.mxu0 %v711
  %v863 = vpop.f32.mrf.mxu0
  %v864 = vadd.f32 0.0, %v863
  %v865 = vpop.f32.mrf.mxu0
  %v866 = vpop.f32.mrf.mxu0
  %v867 = vadd.f32 0.0, %v866
  %v868 = vpop.f32.mrf.mxu0
  %869 = vmatprep.mubr.bf16.mxu0 %v727
  %870 = vmatmul.mubr.bf16.gmra.mxu0 %v710
  %v871 = vpop.f32.mrf.mxu0
  %v872 = vadd.f32 0.0, %v871
  %v873 = vpop.f32.mrf.mxu0
  %v874 = vpop.f32.mrf.mxu0
  %v875 = vpop.f32.mrf.mxu0
  %876 = vdwg.mxu0
  %v877 = vadd.f32 %v661, %v864
  %v878 = vadd.f32 %v664, %v867
  %v879 = vadd.f32 %v669, %v872
  %v880 = vld [vmem:[#allocation2] sm:$0x8]
  %v881 = vld [vmem:[#allocation2 + $0x8] sm:$0xf]
  %v882 = vld [vmem:[#allocation2 + $0x10] sm:$0xf]
  %v883 = vld [vmem:[#allocation2 + $0x18] sm:$0x1]
  %v888 = vunpack.c.l.b16 %v880
  %v889 = vunpack.c.l.b16 %v881
  %v890 = vunpack.c.l.b16 %v882
  %v891 = vunpack.c.l.b16 %v883
  %v892 = vpack.c.b16 %v889, %v888
  %v893 = vpack.c.b16 %v891, %v890
  %vm894 = vcmask 1044480
  %v895 = vrot.slane %v892, 3
  %v896 = vrot.slane %v893, 3
  %v897 = vsel %vm894, %v895, %v896
  %v916 = vunpack.c.l.b16 %v154
  %v917 = vunpack.c.l.b16 %v155
  %v918 = vunpack.c.l.b16 %v156
  %v919 = vunpack.c.l.b16 %v157
  %v920 = vunpack.c.l.b16 %v158
  %v921 = vunpack.c.l.b16 %v159
  %v922 = vunpack.c.l.b16 %v160
  %v923 = vunpack.c.l.b16 %v161
  %v924 = vunpack.c.l.b16 %v162
  %v925 = vunpack.c.l.b16 %v163
  %v926 = vunpack.c.l.b16 %v164
  %v927 = vunpack.c.l.b16 %v165
  %v928 = vunpack.c.l.b16 %v166
  %v929 = vunpack.c.l.b16 %v167
  %v930 = vunpack.c.l.b16 %v168
  %v931 = vunpack.c.l.b16 %v169
  %v932 = vpack.c.b16 %v917, %v916
  %v933 = vpack.c.b16 %v919, %v918
  %v934 = vpack.c.b16 %v921, %v920
  %v935 = vpack.c.b16 %v923, %v922
  %v936 = vpack.c.b16 %v925, %v924
  %v937 = vpack.c.b16 %v927, %v926
  %v938 = vpack.c.b16 %v929, %v928
  %v939 = vpack.c.b16 %v931, %v930
  %948 = vmatprep.subr.bf16.mxu0 0
  %949 = vmatpush1.bf16.msra.mxu0 %v939
  %950 = vmatprep.subr.bf16.mxu0 0
  %951 = vmatpush1.bf16.msra.mxu0 %v938
  %952 = vmatprep.subr.bf16.mxu0 0
  %953 = vmatpush1.bf16.msra.mxu0 %v937
  %954 = vmatprep.subr.bf16.mxu0 0
  %955 = vmatpush1.bf16.msra.mxu0 %v936
  %956 = vmatprep.subr.bf16.mxu0 0
  %957 = vmatpush1.bf16.msra.mxu0 %v935
  %958 = vmatprep.subr.bf16.mxu0 0
  %959 = vmatpush1.bf16.msra.mxu0 %v934
  %960 = vmatprep.subr.bf16.mxu0 0
  %961 = vmatpush1.bf16.msra.mxu0 %v933
  %962 = vmatprep.subr.bf16.mxu0 0
  %963 = vmatpush1.bf16.msra.mxu0 %v932
  %964 = vmatprep.subr.bf16.mxu0 0
  %965 = vmatpush2.bf16.msra.mxu0 0
  %966 = vmatprep.subr.bf16.mxu0 0
  %967 = vmatpush2.bf16.msra.mxu0 0
  %968 = vmatprep.subr.bf16.mxu0 0
  %969 = vmatpush2.bf16.msra.mxu0 0
  %970 = vmatprep.subr.bf16.mxu0 0
  %971 = vmatpush2.bf16.msra.mxu0 0
  %972 = vmatprep.subr.bf16.mxu0 0
  %973 = vmatpush2.bf16.msra.mxu0 0
  %974 = vmatprep.subr.bf16.mxu0 0
  %975 = vmatpush2.bf16.msra.mxu0 0
  %976 = vmatprep.subr.bf16.mxu0 0
  %977 = vmatpush2.bf16.msra.mxu0 0
  %978 = vmatprep.subr.bf16.mxu0 0
  %979 = vmatpush2.bf16.msra.mxu0 0
  %980 = vmatprep.mubr.bf16.mxu0 0
  %981 = vmatmul.mubr.bf16.gmra.mxu0 %v897
  %v982 = vpop.f32.mrf.mxu0
  %v983 = vadd.f32 0.0, %v982
  %v984 = vpop.f32.mrf.mxu0
  %v985 = vpop.f32.mrf.mxu0
  %v986 = vadd.f32 0.0, %v985
  %v987 = vpop.f32.mrf.mxu0
  %988 = vmatprep.mubr.bf16.mxu0 0
  %989 = vmatmul.mubr.bf16.gmra.mxu0 %v896
  %v990 = vpop.f32.mrf.mxu0
  %v991 = vadd.f32 0.0, %v990
  %v992 = vpop.f32.mrf.mxu0
  %v993 = vpop.f32.mrf.mxu0
  %v994 = vpop.f32.mrf.mxu0
  %995 = vdwg.mxu0
  %v996 = vadd.f32 %v877, %v983
  %v997 = vadd.f32 %v878, %v986
  %v998 = vadd.f32 %v879, %v991
  %v999 = vlaneseq
  %v1000 = vshrl.u32 %v999, 7
  %v1001 = vadd.s32 %v1000, 8
  %v1002 = vadd.s32 %v1000, 16
  %vm1003 = vcmp.lt.s32.totalorder %v1000, 0
  %v1004 = vsub.s32 0, %v1000
  %v1005 = vsel %vm1003, %v1004, %v1000
  %v1006 = vmul.u32.u64.compose %v1005, 3435973837
  %v1007 = vextract.low.u32 %v1006
  %v1008 = vextract.high.u32 %v1006
  %v1009 = vshrl.u32 %v1008, 2
  %v1010 = vmul.u32 %v1009, 5
  %v1011 = vsub.s32 %v1005, %v1010
  %v1012 = vsub.s32 0, %v1011
  %v1013 = vsel %vm1003, %v1012, %v1011
  %vm1014 = vcmp.lt.s32.totalorder %v1001, 0
  %v1015 = vsub.s32 0, %v1001
  %v1016 = vsel %vm1014, %v1015, %v1001
  %v1017 = vmul.u32.u64.compose %v1016, 3435973837
  %v1018 = vextract.low.u32 %v1017
  %v1019 = vextract.high.u32 %v1017
  %v1020 = vshrl.u32 %v1019, 2
  %v1021 = vmul.u32 %v1020, 5
  %v1022 = vsub.s32 %v1016, %v1021
  %v1023 = vsub.s32 0, %v1022
  %v1024 = vsel %vm1014, %v1023, %v1022
  %vm1025 = vcmp.lt.s32.totalorder %v1002, 0
  %v1026 = vsub.s32 0, %v1002
  %v1027 = vsel %vm1025, %v1026, %v1002
  %v1028 = vmul.u32.u64.compose %v1027, 3435973837
  %v1029 = vextract.low.u32 %v1028
  %v1030 = vextract.high.u32 %v1028
  %v1031 = vshrl.u32 %v1030, 2
  %v1032 = vmul.u32 %v1031, 5
  %v1033 = vsub.s32 %v1027, %v1032
  %v1034 = vsub.s32 0, %v1033
  %v1035 = vsel %vm1025, %v1034, %v1033
  %vm1036 = vcmp.ne.s32.totalorder %v1013, 0
  %vm1037 = vcmp.ne.s32.totalorder %v1024, 0
  %vm1038 = vcmp.ne.s32.totalorder %v1035, 0
  %vm1039 = vcmp.lt.s32.totalorder %v1013, 0
  %vm1040 = vcmp.lt.s32.totalorder %v1024, 0
  %vm1041 = vcmp.lt.s32.totalorder %v1035, 0
  %vm1042 = vmand %vm1039, %vm1036
  %vm1043 = vmand %vm1040, %vm1037
  %vm1044 = vmand %vm1041, %vm1038
  %v1045 = vadd.s32 %v1013, 5
  %v1046 = vadd.s32 %v1024, 5
  %v1047 = vadd.s32 %v1035, 5
  %v1048 = vsel %vm1042, %v1045, %v1013
  %v1049 = vsel %vm1043, %v1046, %v1024
  %v1050 = vsel %vm1044, %v1047, %v1035
  %vm1051 = vcmp.lt.s32.totalorder %v1048, 4
  %vm1052 = vcmp.lt.s32.totalorder %v1049, 4
  %vm1053 = vcmp.lt.s32.totalorder %v1050, 4
  %v1054 = vsel %vm1051, 1, 0
  %v1055 = vsel %vm1052, 1, 0
  %v1056 = vsel %vm1053, 1, 0
  %vm1057 = vcmp.eq.s32.totalorder %v1054, 1
  %vm1058 = vcmp.eq.s32.totalorder %v1055, 1
  %vm1059 = vcmp.eq.s32.totalorder %v1056, 1
  %v1060 = vsel %vm1057, %v996, 0.0
  %v1061 = vsel %vm1058, %v997, 0.0
  %v1062 = vsel %vm1059, %v998, 0.0
  %v1063 = vadd.f32 %v1060, %v1061
  %vm1064 = vcmask 1043456
  %v1065 = vsel %vm1064, %v1062, 0.0
  %v1066 = vadd.f32 %v1063, %v1065
  %v1067 = vrot.slane %v1066, 4
  %v1068 = vadd.f32 %v1066, %v1067
  %v1069 = vrot.slane %v1068, 2
  %v1070 = vadd.f32 %v1068, %v1069
  %v1071 = vrot.slane %v1070, 1
  %v1072 = vadd.f32 %v1070, %v1071
  %v1073 = vadd.f32 %v1072, 0.0
  %v1074 = vmul.f32 %v1060, %v1060
  %v1075 = vmul.f32 %v1061, %v1061
  %v1076 = vmul.f32 %v1062, %v1062
  %v1077 = vadd.f32 %v1074, %v1075
  %v1078 = vsel %vm1064, %v1076, 0.0
  %v1079 = vadd.f32 %v1077, %v1078
  %v1080 = vrot.slane %v1079, 4
  %v1081 = vadd.f32 %v1079, %v1080
  %v1082 = vrot.slane %v1081, 2
  %v1083 = vadd.f32 %v1081, %v1082
  %v1084 = vrot.slane %v1083, 1
  %v1085 = vadd.f32 %v1083, %v1084
  %v1086 = vadd.f32 %v1085, 0.0
  %v1088 = vlaneseq
  %v1089 = vshrl.u32 %v1088, 7
  %v1090 = vsub.s32 0, %v1089
  %v1091 = vrot.slane %v71, %v1090
  %v1093 = vadd.f32 %v996, %v1091
  %v1094 = vadd.f32 %v997, %v1091
  %v1095 = vadd.f32 %v998, %v1091
  %v1096 = vpack.c.bf16 %v1094, %v1093
  %v1097 = vpack.c.bf16 %v1095, %v1095
  %v1100 = vunpack.c.l.b16 %v1096
  %v1101 = vunpack.c.h.b16 %v1096
  %v1102 = vunpack.c.l.b16 %v1097
  %v1103 = vpack.c.b16 %v1100, %v1100
  %v1104 = vpack.c.b16 %v1101, %v1101
  %v1105 = vpack.c.b16 %v1102, %v1102
  %1109 = vst [vmem:[%s61] sm:$0xf] %v1103
  %1110 = vst [vmem:[%s61 + $0x4] sm:$0xf] %v1104
  %1111 = vst [vmem:[%s61 + $0x8] sm:$0x3] %v1105
  %v1112 = vld [vmem:[%s6] sm:$0x1]
  %v1113 = vstv %s384
  %v1114 = vmul.f32 %v1113, %v1073
  %v1115 = vadd.f32 %v1112, %v1114
  %1116 = vst [vmem:[%s6] sm:$0x1] %v1115
  %v1117 = vld [vmem:[%s7] sm:$0x1]
  %v1118 = vmul.f32 %v1113, %v1086
  %v1119 = vadd.f32 %v1117, %v1118
  %1120 = vst [vmem:[%s7] sm:$0x1] %v1119
  %s1121 = scalar_lea.vmem %s52, 16
  %v1122 = vld [vmem:[%s1121] sm:$0xf]
  %v1123 = vld [vmem:[%s1121 + $0x4] sm:$0xf]
  %v1124 = vld [vmem:[%s1121 + $0x8] sm:$0xf]
  %v1125 = vld [vmem:[%s1121 + $0xc] sm:$0x7]
  %v1126 = vld [vmem:[%s1] sm:$0xff]
  %v1127 = vld [vmem:[%s1 + $0x8] sm:$0xff]
  %v1128 = vld [vmem:[%s1 + $0x10] sm:$0xff]
  %v1129 = vld [vmem:[%s1 + $0x18] sm:$0xff]
  %v1130 = vld [vmem:[%s1 + $0x20] sm:$0xff]
  %v1131 = vld [vmem:[%s1 + $0x28] sm:$0xff]
  %v1132 = vld [vmem:[%s1 + $0x30] sm:$0xff]
  %v1133 = vld [vmem:[%s1 + $0x38] sm:$0xff]
  %v1134 = vld [vmem:[%s1 + $0x40] sm:$0xff]
  %v1135 = vld [vmem:[%s1 + $0x48] sm:$0xff]
  %v1136 = vld [vmem:[%s1 + $0x50] sm:$0xff]
  %v1137 = vld [vmem:[%s1 + $0x58] sm:$0xff]
  %v1138 = vld [vmem:[%s1 + $0x60] sm:$0xff]
  %v1139 = vld [vmem:[%s1 + $0x68] sm:$0xff]
  %v1144 = vunpack.c.l.b16 %v1122
  %v1145 = vunpack.c.l.b16 %v1123
  %v1146 = vunpack.c.l.b16 %v1124
  %v1147 = vunpack.c.l.b16 %v1125
  %v1148 = vpack.c.b16 %v1145, %v1144
  %v1149 = vpack.c.b16 %v1147, %v1146
  %v1164 = vunpack.c.l.b16 %v1126
  %v1165 = vunpack.c.h.b16 %v1126
  %v1166 = vunpack.c.l.b16 %v1127
  %v1167 = vunpack.c.h.b16 %v1127
  %v1168 = vunpack.c.l.b16 %v1128
  %v1169 = vunpack.c.h.b16 %v1128
  %v1170 = vunpack.c.l.b16 %v1129
  %v1171 = vunpack.c.h.b16 %v1129
  %v1172 = vunpack.c.l.b16 %v1130
  %v1173 = vunpack.c.h.b16 %v1130
  %v1174 = vunpack.c.l.b16 %v1131
  %v1175 = vunpack.c.h.b16 %v1131
  %v1176 = vunpack.c.l.b16 %v1132
  %v1177 = vunpack.c.h.b16 %v1132
  %v1178 = vunpack.c.l.b16 %v1133
  %v1179 = vunpack.c.h.b16 %v1133
  %v1180 = vunpack.c.l.b16 %v1134
  %v1181 = vunpack.c.h.b16 %v1134
  %v1182 = vunpack.c.l.b16 %v1135
  %v1183 = vunpack.c.h.b16 %v1135
  %v1184 = vunpack.c.l.b16 %v1136
  %v1185 = vunpack.c.h.b16 %v1136
  %v1186 = vunpack.c.l.b16 %v1137
  %v1187 = vunpack.c.h.b16 %v1137
  %v1188 = vunpack.c.l.b16 %v1138
  %v1189 = vunpack.c.h.b16 %v1138
  %v1190 = vunpack.c.l.b16 %v1139
  %v1191 = vunpack.c.h.b16 %v1139
  %v1192 = vpack.c.b16 %v1166, %v1164
  %v1193 = vpack.c.b16 %v1167, %v1165
  %v1194 = vpack.c.b16 %v1170, %v1168
  %v1195 = vpack.c.b16 %v1171, %v1169
  %v1196 = vpack.c.b16 %v1174, %v1172
  %v1197 = vpack.c.b16 %v1175, %v1173
  %v1198 = vpack.c.b16 %v1178, %v1176
  %v1199 = vpack.c.b16 %v1179, %v1177
  %v1200 = vpack.c.b16 %v1182, %v1180
  %v1201 = vpack.c.b16 %v1183, %v1181
  %v1202 = vpack.c.b16 %v1186, %v1184
  %v1203 = vpack.c.b16 %v1187, %v1185
  %v1204 = vpack.c.b16 %v1190, %v1188
  %v1205 = vpack.c.b16 %v1191, %v1189
  %v1221 = vsel %vm270, %v1148, 0
  %v1224 = vsel %vm270, %v1149, 0
  %1226 = vmatprep.subr.bf16.mxu0 0
  %1227 = vmatpush1.bf16.msra.mxu0 0
  %1228 = vmatprep.subr.bf16.mxu0 %v1205
  %1229 = vmatpush1.bf16.msra.mxu0 %v1204
  %1230 = vmatprep.subr.bf16.mxu0 %v1203
  %1231 = vmatpush1.bf16.msra.mxu0 %v1202
  %1232 = vmatprep.subr.bf16.mxu0 %v1201
  %1233 = vmatpush1.bf16.msra.mxu0 %v1200
  %1234 = vmatprep.subr.bf16.mxu0 %v1199
  %1235 = vmatpush1.bf16.msra.mxu0 %v1198
  %1236 = vmatprep.subr.bf16.mxu0 %v1197
  %1237 = vmatpush1.bf16.msra.mxu0 %v1196
  %1238 = vmatprep.subr.bf16.mxu0 %v1195
  %1239 = vmatpush1.bf16.msra.mxu0 %v1194
  %1240 = vmatprep.subr.bf16.mxu0 %v1193
  %1241 = vmatpush1.bf16.msra.mxu0 %v1192
  %1242 = vmatprep.subr.bf16.mxu0 0
  %1243 = vmatpush2.bf16.msra.mxu0 0
  %1244 = vmatprep.subr.bf16.mxu0 0
  %1245 = vmatpush2.bf16.msra.mxu0 0
  %1246 = vmatprep.subr.bf16.mxu0 0
  %1247 = vmatpush2.bf16.msra.mxu0 0
  %1248 = vmatprep.subr.bf16.mxu0 0
  %1249 = vmatpush2.bf16.msra.mxu0 0
  %1250 = vmatprep.subr.bf16.mxu0 0
  %1251 = vmatpush2.bf16.msra.mxu0 0
  %1252 = vmatprep.subr.bf16.mxu0 0
  %1253 = vmatpush2.bf16.msra.mxu0 0
  %1254 = vmatprep.subr.bf16.mxu0 0
  %1255 = vmatpush2.bf16.msra.mxu0 0
  %1256 = vmatprep.subr.bf16.mxu0 0
  %1257 = vmatpush2.bf16.msra.mxu0 0
  %1258 = vmatprep.mubr.bf16.mxu0 0
  %1259 = vmatmul.mubr.bf16.gmra.mxu0 %v1221
  %v1260 = vpop.f32.mrf.mxu0
  %v1261 = vadd.f32 0.0, %v1260
  %v1262 = vpop.f32.mrf.mxu0
  %v1263 = vadd.f32 0.0, %v1262
  %v1264 = vpop.f32.mrf.mxu0
  %v1265 = vadd.f32 0.0, %v1264
  %v1266 = vpop.f32.mrf.mxu0
  %v1267 = vadd.f32 0.0, %v1266
  %1268 = vmatprep.mubr.bf16.mxu0 0
  %1269 = vmatmul.mubr.bf16.gmra.mxu0 %v1224
  %v1270 = vpop.f32.mrf.mxu0
  %v1271 = vadd.f32 0.0, %v1270
  %v1272 = vpop.f32.mrf.mxu0
  %v1273 = vadd.f32 0.0, %v1272
  %v1274 = vpop.f32.mrf.mxu0
  %v1275 = vadd.f32 0.0, %v1274
  %v1276 = vpop.f32.mrf.mxu0
  %v1277 = vadd.f32 0.0, %v1276
  %1278 = vdwg.mxu0
  %vm1279 = vcmp.gt.f32.partialorder %v1261, 0.0
  %vm1280 = vcmp.gt.f32.partialorder %v1263, 0.0
  %vm1281 = vcmp.gt.f32.partialorder %v1265, 0.0
  %vm1282 = vcmp.gt.f32.partialorder %v1267, 0.0
  %vm1283 = vcmp.gt.f32.partialorder %v1271, 0.0
  %vm1284 = vcmp.gt.f32.partialorder %v1273, 0.0
  %vm1285 = vcmp.gt.f32.partialorder %v1275, 0.0
  %vm1286 = vcmp.gt.f32.partialorder %v1277, 0.0
  %v1287 = vmul.f32 %v1261, 0.2
  %v1288 = vmul.f32 %v1263, 0.2
  %v1289 = vmul.f32 %v1265, 0.2
  %v1290 = vmul.f32 %v1267, 0.2
  %v1291 = vmul.f32 %v1271, 0.2
  %v1292 = vmul.f32 %v1273, 0.2
  %v1293 = vmul.f32 %v1275, 0.2
  %v1294 = vmul.f32 %v1277, 0.2
  %v1295 = vsel %vm1279, %v1261, %v1287
  %v1296 = vsel %vm1280, %v1263, %v1288
  %v1297 = vsel %vm1281, %v1265, %v1289
  %v1298 = vsel %vm1282, %v1267, %v1290
  %v1299 = vsel %vm1283, %v1271, %v1291
  %v1300 = vsel %vm1284, %v1273, %v1292
  %v1301 = vsel %vm1285, %v1275, %v1293
  %v1302 = vsel %vm1286, %v1277, %v1294
  %v1303 = vpack.c.bf16 %v1297, %v1295
  %v1304 = vpack.c.bf16 %v1298, %v1296
  %v1305 = vpack.c.bf16 %v1301, %v1299
  %v1306 = vpack.c.bf16 %v1302, %v1300
  %v1311 = vunpack.c.l.b16 %v1303
  %v1312 = vunpack.c.l.b16 %v1304
  %v1313 = vunpack.c.h.b16 %v1303
  %v1314 = vunpack.c.h.b16 %v1304
  %v1315 = vunpack.c.l.b16 %v1305
  %v1316 = vunpack.c.l.b16 %v1306
  %v1317 = vunpack.c.h.b16 %v1305
  %v1318 = vunpack.c.h.b16 %v1306
  %v1319 = vpack.c.b16 %v1312, %v1311
  %v1320 = vpack.c.b16 %v1314, %v1313
  %v1321 = vpack.c.b16 %v1316, %v1315
  %v1322 = vpack.c.b16 %v1318, %v1317
  %1327 = vst [vmem:[#allocation2] sm:$0xff] %v1319
  %1328 = vst [vmem:[#allocation2 + $0x8] sm:$0xff] %v1320
  %1329 = vst [vmem:[#allocation2 + $0x10] sm:$0xff] %v1321
  %1330 = vst [vmem:[#allocation2 + $0x18] sm:$0x77] %v1322
  %s1331 = sadd.s32 %s171, 1
  %p1332 = scmp.lt.s32.totalorder %s1331, 2
  %s1333 = scalar_select %p1332, 1, 0
  %s1334 = scvt.s32.f32 %s1333
  %v1335 = vld [vmem:[#allocation2] sm:$0xff]
  %v1336 = vld [vmem:[#allocation2 + $0x8] sm:$0xff]
  %v1337 = vld [vmem:[#allocation2 + $0x10] sm:$0x33]
  %v1338 = vld [vmem:[#allocation2] sm:$0xf]
  %v1339 = vld [vmem:[#allocation2 + $0x8] sm:$0xf]
  %v1340 = vld [vmem:[#allocation2 + $0x10] sm:$0x7]
  %v1344 = vunpack.c.l.b16 %v1338
  %v1345 = vunpack.c.l.b16 %v1339
  %v1346 = vunpack.c.l.b16 %v1340
  %v1347 = vpack.c.b16 %v1345, %v1344
  %v1348 = vpack.c.b16 %v1346, %v1346
  %v1350 = vshrl.u32 %v1347, 16
  %v1352 = vshll.u32 %v1347, 16
  %v1354 = vrot.slane %v1352, 1
  %v1355 = vor.u32 %v1350, %v1354
  %v1357 = vshll.u32 %v1348, 16
  %v1359 = vrot.slane %v1357, 1
  %v1360 = vsel %vm399, %v1355, %v1359
  %v1361 = vshrl.u32 %v1348, 16
  %v1363 = vor.u32 %v1361, %v1359
  %1366 = vmatprep.subr.bf16.mxu0 0
  %1367 = vmatpush1.bf16.msra.mxu0 %v456
  %1368 = vmatprep.subr.bf16.mxu0 0
  %1369 = vmatpush1.bf16.msra.mxu0 %v455
  %1370 = vmatprep.subr.bf16.mxu0 0
  %1371 = vmatpush1.bf16.msra.mxu0 %v454
  %1372 = vmatprep.subr.bf16.mxu0 0
  %1373 = vmatpush1.bf16.msra.mxu0 %v453
  %1374 = vmatprep.subr.bf16.mxu0 0
  %1375 = vmatpush1.bf16.msra.mxu0 %v452
  %1376 = vmatprep.subr.bf16.mxu0 0
  %1377 = vmatpush1.bf16.msra.mxu0 %v451
  %1378 = vmatprep.subr.bf16.mxu0 0
  %1379 = vmatpush1.bf16.msra.mxu0 %v450
  %1380 = vmatprep.subr.bf16.mxu0 0
  %1381 = vmatpush1.bf16.msra.mxu0 %v449
  %1382 = vmatprep.subr.bf16.mxu0 0
  %1383 = vmatpush2.bf16.msra.mxu0 0
  %1384 = vmatprep.subr.bf16.mxu0 0
  %1385 = vmatpush2.bf16.msra.mxu0 0
  %1386 = vmatprep.subr.bf16.mxu0 0
  %1387 = vmatpush2.bf16.msra.mxu0 0
  %1388 = vmatprep.subr.bf16.mxu0 0
  %1389 = vmatpush2.bf16.msra.mxu0 0
  %1390 = vmatprep.subr.bf16.mxu0 0
  %1391 = vmatpush2.bf16.msra.mxu0 0
  %1392 = vmatprep.subr.bf16.mxu0 0
  %1393 = vmatpush2.bf16.msra.mxu0 0
  %1394 = vmatprep.subr.bf16.mxu0 0
  %1395 = vmatpush2.bf16.msra.mxu0 0
  %1396 = vmatprep.subr.bf16.mxu0 0
  %1397 = vmatpush2.bf16.msra.mxu0 0
  %1398 = vmatprep.mubr.bf16.mxu0 0
  %1399 = vmatmul.mubr.bf16.gmra.mxu0 %v1360
  %v1400 = vpop.f32.mrf.mxu0
  %v1401 = vadd.f32 0.0, %v1400
  %v1402 = vpop.f32.mrf.mxu0
  %v1403 = vpop.f32.mrf.mxu0
  %v1404 = vadd.f32 0.0, %v1403
  %v1405 = vpop.f32.mrf.mxu0
  %1406 = vmatprep.mubr.bf16.mxu0 0
  %1407 = vmatmul.mubr.bf16.gmra.mxu0 %v1363
  %v1408 = vpop.f32.mrf.mxu0
  %v1409 = vadd.f32 0.0, %v1408
  %v1410 = vpop.f32.mrf.mxu0
  %v1411 = vpop.f32.mrf.mxu0
  %v1412 = vpop.f32.mrf.mxu0
  %1413 = vdwg.mxu0
  %v1417 = vunpack.c.l.b16 %v1335
  %v1418 = vunpack.c.h.b16 %v1335
  %v1419 = vunpack.c.l.b16 %v1336
  %v1420 = vunpack.c.h.b16 %v1336
  %v1421 = vunpack.c.l.b16 %v1337
  %v1422 = vunpack.c.h.b16 %v1337
  %v1423 = vpack.c.b16 %v1419, %v1417
  %v1424 = vpack.c.b16 %v1420, %v1418
  %v1425 = vpack.c.b16 %v1421, %v1421
  %v1426 = vpack.c.b16 %v1422, %v1422
  %1431 = vmatprep.subr.bf16.mxu0 0
  %1432 = vmatpush1.bf16.msra.mxu0 %v601
  %1433 = vmatprep.subr.bf16.mxu0 0
  %1434 = vmatpush1.bf16.msra.mxu0 %v600
  %1435 = vmatprep.subr.bf16.mxu0 0
  %1436 = vmatpush1.bf16.msra.mxu0 %v599
  %1437 = vmatprep.subr.bf16.mxu0 0
  %1438 = vmatpush1.bf16.msra.mxu0 %v598
  %1439 = vmatprep.subr.bf16.mxu0 0
  %1440 = vmatpush1.bf16.msra.mxu0 %v597
  %1441 = vmatprep.subr.bf16.mxu0 0
  %1442 = vmatpush1.bf16.msra.mxu0 %v596
  %1443 = vmatprep.subr.bf16.mxu0 0
  %1444 = vmatpush1.bf16.msra.mxu0 %v595
  %1445 = vmatprep.subr.bf16.mxu0 0
  %1446 = vmatpush1.bf16.msra.mxu0 %v594
  %1447 = vmatprep.subr.bf16.mxu0 0
  %1448 = vmatpush2.bf16.msra.mxu0 %v609
  %1449 = vmatprep.subr.bf16.mxu0 0
  %1450 = vmatpush2.bf16.msra.mxu0 %v608
  %1451 = vmatprep.subr.bf16.mxu0 0
  %1452 = vmatpush2.bf16.msra.mxu0 %v607
  %1453 = vmatprep.subr.bf16.mxu0 0
  %1454 = vmatpush2.bf16.msra.mxu0 %v606
  %1455 = vmatprep.subr.bf16.mxu0 0
  %1456 = vmatpush2.bf16.msra.mxu0 %v605
  %1457 = vmatprep.subr.bf16.mxu0 0
  %1458 = vmatpush2.bf16.msra.mxu0 %v604
  %1459 = vmatprep.subr.bf16.mxu0 0
  %1460 = vmatpush2.bf16.msra.mxu0 %v603
  %1461 = vmatprep.subr.bf16.mxu0 0
  %1462 = vmatpush2.bf16.msra.mxu0 %v602
  %1463 = vmatprep.mubr.bf16.mxu0 %v1424
  %1464 = vmatmul.mubr.bf16.gmra.mxu0 %v1423
  %v1465 = vpop.f32.mrf.mxu0
  %v1466 = vadd.f32 %v1401, %v1465
  %v1467 = vpop.f32.mrf.mxu0
  %v1468 = vpop.f32.mrf.mxu0
  %v1469 = vadd.f32 %v1404, %v1468
  %v1470 = vpop.f32.mrf.mxu0
  %1471 = vmatprep.mubr.bf16.mxu0 %v1426
  %1472 = vmatmul.mubr.bf16.gmra.mxu0 %v1425
  %v1473 = vpop.f32.mrf.mxu0
  %v1474 = vadd.f32 %v1409, %v1473
  %v1475 = vpop.f32.mrf.mxu0
  %v1476 = vpop.f32.mrf.mxu0
  %v1477 = vpop.f32.mrf.mxu0
  %1478 = vdwg.mxu0
  %v1479 = vld [vmem:[#allocation2] sm:$0xcc]
  %v1480 = vld [vmem:[#allocation2 + $0x8] sm:$0xff]
  %v1481 = vld [vmem:[#allocation2 + $0x10] sm:$0xff]
  %v1482 = vld [vmem:[#allocation2 + $0x18] sm:$0x11]
  %v1487 = vunpack.c.l.b16 %v1479
  %v1488 = vunpack.c.h.b16 %v1479
  %v1489 = vunpack.c.l.b16 %v1480
  %v1490 = vunpack.c.h.b16 %v1480
  %v1491 = vunpack.c.l.b16 %v1481
  %v1492 = vunpack.c.h.b16 %v1481
  %v1493 = vunpack.c.l.b16 %v1482
  %v1494 = vunpack.c.h.b16 %v1482
  %v1495 = vpack.c.b16 %v1489, %v1487
  %v1496 = vpack.c.b16 %v1490, %v1488
  %v1497 = vpack.c.b16 %v1493, %v1491
  %v1498 = vpack.c.b16 %v1494, %v1492
  %v1500 = vshrl.u32 %v1495, 16
  %v1502 = vrot.slane %v1500, 2
  %v1503 = vshll.u32 %v1495, 16
  %v1505 = vrot.slane %v1503, 3
  %v1506 = vor.u32 %v1502, %v1505
  %v1508 = vshrl.u32 %v1497, 16
  %v1510 = vrot.slane %v1508, 2
  %v1511 = vshll.u32 %v1497, 16
  %v1513 = vrot.slane %v1511, 3
  %v1514 = vor.u32 %v1510, %v1513
  %v1515 = vsel %vm694, %v1506, %v1514
  %v1517 = vshrl.u32 %v1496, 16
  %v1519 = vrot.slane %v1517, 2
  %v1520 = vshll.u32 %v1496, 16
  %v1522 = vrot.slane %v1520, 3
  %v1523 = vor.u32 %v1519, %v1522
  %v1525 = vshrl.u32 %v1498, 16
  %v1527 = vrot.slane %v1525, 2
  %v1528 = vshll.u32 %v1498, 16
  %v1530 = vrot.slane %v1528, 3
  %v1531 = vor.u32 %v1527, %v1530
  %v1532 = vsel %vm694, %v1523, %v1531
  %1537 = vmatprep.subr.bf16.mxu0 0
  %1538 = vmatpush1.bf16.msra.mxu0 %v804
  %1539 = vmatprep.subr.bf16.mxu0 0
  %1540 = vmatpush1.bf16.msra.mxu0 %v803
  %1541 = vmatprep.subr.bf16.mxu0 0
  %1542 = vmatpush1.bf16.msra.mxu0 %v802
  %1543 = vmatprep.subr.bf16.mxu0 0
  %1544 = vmatpush1.bf16.msra.mxu0 %v801
  %1545 = vmatprep.subr.bf16.mxu0 0
  %1546 = vmatpush1.bf16.msra.mxu0 %v800
  %1547 = vmatprep.subr.bf16.mxu0 0
  %1548 = vmatpush1.bf16.msra.mxu0 %v799
  %1549 = vmatprep.subr.bf16.mxu0 0
  %1550 = vmatpush1.bf16.msra.mxu0 %v798
  %1551 = vmatprep.subr.bf16.mxu0 0
  %1552 = vmatpush1.bf16.msra.mxu0 %v797
  %1553 = vmatprep.subr.bf16.mxu0 0
  %1554 = vmatpush2.bf16.msra.mxu0 %v812
  %1555 = vmatprep.subr.bf16.mxu0 0
  %1556 = vmatpush2.bf16.msra.mxu0 %v811
  %1557 = vmatprep.subr.bf16.mxu0 0
  %1558 = vmatpush2.bf16.msra.mxu0 %v810
  %1559 = vmatprep.subr.bf16.mxu0 0
  %1560 = vmatpush2.bf16.msra.mxu0 %v809
  %1561 = vmatprep.subr.bf16.mxu0 0
  %1562 = vmatpush2.bf16.msra.mxu0 %v808
  %1563 = vmatprep.subr.bf16.mxu0 0
  %1564 = vmatpush2.bf16.msra.mxu0 %v807
  %1565 = vmatprep.subr.bf16.mxu0 0
  %1566 = vmatpush2.bf16.msra.mxu0 %v806
  %1567 = vmatprep.subr.bf16.mxu0 0
  %1568 = vmatpush2.bf16.msra.mxu0 %v805
  %1569 = vmatprep.mubr.bf16.mxu0 %v1532
  %1570 = vmatmul.mubr.bf16.gmra.mxu0 %v1515
  %v1571 = vpop.f32.mrf.mxu0
  %v1572 = vadd.f32 0.0, %v1571
  %v1573 = vpop.f32.mrf.mxu0
  %v1574 = vpop.f32.mrf.mxu0
  %v1575 = vadd.f32 0.0, %v1574
  %v1576 = vpop.f32.mrf.mxu0
  %1577 = vmatprep.mubr.bf16.mxu0 %v1531
  %1578 = vmatmul.mubr.bf16.gmra.mxu0 %v1514
  %v1579 = vpop.f32.mrf.mxu0
  %v1580 = vadd.f32 0.0, %v1579
  %v1581 = vpop.f32.mrf.mxu0
  %v1582 = vpop.f32.mrf.mxu0
  %v1583 = vpop.f32.mrf.mxu0
  %1584 = vdwg.mxu0
  %v1585 = vadd.f32 %v1466, %v1572
  %v1586 = vadd.f32 %v1469, %v1575
  %v1587 = vadd.f32 %v1474, %v1580
  %v1588 = vld [vmem:[#allocation2] sm:$0x8]
  %v1589 = vld [vmem:[#allocation2 + $0x8] sm:$0xf]
  %v1590 = vld [vmem:[#allocation2 + $0x10] sm:$0xf]
  %v1591 = vld [vmem:[#allocation2 + $0x18] sm:$0x1]
  %v1596 = vunpack.c.l.b16 %v1588
  %v1597 = vunpack.c.l.b16 %v1589
  %v1598 = vunpack.c.l.b16 %v1590
  %v1599 = vunpack.c.l.b16 %v1591
  %v1600 = vpack.c.b16 %v1597, %v1596
  %v1601 = vpack.c.b16 %v1599, %v1598
  %v1602 = vrot.slane %v1600, 3
  %v1603 = vrot.slane %v1601, 3
  %v1604 = vsel %vm894, %v1602, %v1603
  %1607 = vmatprep.subr.bf16.mxu0 0
  %1608 = vmatpush1.bf16.msra.mxu0 %v939
  %1609 = vmatprep.subr.bf16.mxu0 0
  %1610 = vmatpush1.bf16.msra.mxu0 %v938
  %1611 = vmatprep.subr.bf16.mxu0 0
  %1612 = vmatpush1.bf16.msra.mxu0 %v937
  %1613 = vmatprep.subr.bf16.mxu0 0
  %1614 = vmatpush1.bf16.msra.mxu0 %v936
  %1615 = vmatprep.subr.bf16.mxu0 0
  %1616 = vmatpush1.bf16.msra.mxu0 %v935
  %1617 = vmatprep.subr.bf16.mxu0 0
  %1618 = vmatpush1.bf16.msra.mxu0 %v934
  %1619 = vmatprep.subr.bf16.mxu0 0
  %1620 = vmatpush1.bf16.msra.mxu0 %v933
  %1621 = vmatprep.subr.bf16.mxu0 0
  %1622 = vmatpush1.bf16.msra.mxu0 %v932
  %1623 = vmatprep.subr.bf16.mxu0 0
  %1624 = vmatpush2.bf16.msra.mxu0 0
  %1625 = vmatprep.subr.bf16.mxu0 0
  %1626 = vmatpush2.bf16.msra.mxu0 0
  %1627 = vmatprep.subr.bf16.mxu0 0
  %1628 = vmatpush2.bf16.msra.mxu0 0
  %1629 = vmatprep.subr.bf16.mxu0 0
  %1630 = vmatpush2.bf16.msra.mxu0 0
  %1631 = vmatprep.subr.bf16.mxu0 0
  %1632 = vmatpush2.bf16.msra.mxu0 0
  %1633 = vmatprep.subr.bf16.mxu0 0
  %1634 = vmatpush2.bf16.msra.mxu0 0
  %1635 = vmatprep.subr.bf16.mxu0 0
  %1636 = vmatpush2.bf16.msra.mxu0 0
  %1637 = vmatprep.subr.bf16.mxu0 0
  %1638 = vmatpush2.bf16.msra.mxu0 0
  %1639 = vmatprep.mubr.bf16.mxu0 0
  %1640 = vmatmul.mubr.bf16.gmra.mxu0 %v1604
  %v1641 = vpop.f32.mrf.mxu0
  %v1642 = vadd.f32 0.0, %v1641
  %v1643 = vpop.f32.mrf.mxu0
  %v1644 = vpop.f32.mrf.mxu0
  %v1645 = vadd.f32 0.0, %v1644
  %v1646 = vpop.f32.mrf.mxu0
  %1647 = vmatprep.mubr.bf16.mxu0 0
  %1648 = vmatmul.mubr.bf16.gmra.mxu0 %v1603
  %v1649 = vpop.f32.mrf.mxu0
  %v1650 = vadd.f32 0.0, %v1649
  %v1651 = vpop.f32.mrf.mxu0
  %v1652 = vpop.f32.mrf.mxu0
  %v1653 = vpop.f32.mrf.mxu0
  %1654 = vdwg.mxu0
  %v1655 = vadd.f32 %v1585, %v1642
  %v1656 = vadd.f32 %v1586, %v1645
  %v1657 = vadd.f32 %v1587, %v1650
  %v1658 = vsel %vm1057, %v1655, 0.0
  %v1659 = vsel %vm1058, %v1656, 0.0
  %v1660 = vsel %vm1059, %v1657, 0.0
  %v1661 = vadd.f32 %v1658, %v1659
  %v1662 = vsel %vm1064, %v1660, 0.0
  %v1663 = vadd.f32 %v1661, %v1662
  %v1664 = vrot.slane %v1663, 4
  %v1665 = vadd.f32 %v1663, %v1664
  %v1666 = vrot.slane %v1665, 2
  %v1667 = vadd.f32 %v1665, %v1666
  %v1668 = vrot.slane %v1667, 1
  %v1669 = vadd.f32 %v1667, %v1668
  %v1670 = vadd.f32 %v1669, 0.0
  %v1671 = vmul.f32 %v1658, %v1658
  %v1672 = vmul.f32 %v1659, %v1659
  %v1673 = vmul.f32 %v1660, %v1660
  %v1674 = vadd.f32 %v1671, %v1672
  %v1675 = vsel %vm1064, %v1673, 0.0
  %v1676 = vadd.f32 %v1674, %v1675
  %v1677 = vrot.slane %v1676, 4
  %v1678 = vadd.f32 %v1676, %v1677
  %v1679 = vrot.slane %v1678, 2
  %v1680 = vadd.f32 %v1678, %v1679
  %v1681 = vrot.slane %v1680, 1
  %v1682 = vadd.f32 %v1680, %v1681
  %v1683 = vadd.f32 %v1682, 0.0
  %v1684 = vadd.f32 %v1655, %v1091
  %v1685 = vadd.f32 %v1656, %v1091
  %v1686 = vadd.f32 %v1657, %v1091
  %v1687 = vpack.c.bf16 %v1685, %v1684
  %v1688 = vpack.c.bf16 %v1686, %v1686
  %v1691 = vunpack.c.l.b16 %v1687
  %v1692 = vunpack.c.h.b16 %v1687
  %v1693 = vunpack.c.l.b16 %v1688
  %v1694 = vpack.c.b16 %v1691, %v1691
  %v1695 = vpack.c.b16 %v1692, %v1692
  %v1696 = vpack.c.b16 %v1693, %v1693
  %s1700 = scalar_lea.vmem %s61, 12
  %1701 = vst [vmem:[%s1700] sm:$0xf] %v1694
  %1702 = vst [vmem:[%s1700 + $0x4] sm:$0xf] %v1695
  %1703 = vst [vmem:[%s1700 + $0x8] sm:$0x3] %v1696
  %v1704 = vld [vmem:[%s6] sm:$0x1]
  %v1705 = vstv %s1334
  %v1706 = vmul.f32 %v1705, %v1670
  %v1707 = vadd.f32 %v1704, %v1706
  %1708 = vst [vmem:[%s6] sm:$0x1] %v1707
  %v1709 = vld [vmem:[%s7] sm:$0x1]
  %v1710 = vmul.f32 %v1705, %v1683
  %v1711 = vadd.f32 %v1709, %v1710
  %1712 = vst [vmem:[%s7] sm:$0x1] %v1711
  %s1713 = sadd.s32 0, 0
  %s1714 = smul.u32 2, %s1713
  %p1715 = scmp.lt.s32.totalorder %s1714, 1
  %s1716 = scalar_select %p1715, %s1714, 1
  %s1717 = smul.addr %s1716, 3
  %s1718 = smul.addr %s1717, 4
  %s1719 = scalar_lea.vmem %s5, %s1718
  // Predicated region
  $region26: #{discriminator_forward.2} parent=0 // pred_check
    _
  $region27: #{discriminator_forward.2} parent=0 // pred_check_branch
    %1721 = sbr.rel (0) target = $region29
  $region28: #{discriminator_forward.2} parent=0 // pred_region
    %s1722 = sadd.s32 0, 0
    %s1723 = smul.u32 2, %s1722
  $region29: #{discriminator_forward.2} parent=0 // pred_fallthru
    _
  // Predicated region
  $region30: #{discriminator_forward.2} parent=0 // pred_check
    _
  $region31: #{discriminator_forward.2} parent=0 // pred_check_branch
    %1725 = sbr.rel (0) target = $region33
  $region32: #{discriminator_forward.2} parent=0 // pred_region
    _
  $region33: #{discriminator_forward.2} parent=0 // pred_fallthru
    _
  // Predicated region
  $region34: #{discriminator_forward.2} parent=0 // pred_check
    _
  $region35: #{discriminator_forward.2} parent=0 // pred_check_branch
    %1727 = sbr.rel (0) target = $region37
  $region36: #{discriminator_forward.2} parent=0 // pred_region
    _
  $region37: #{discriminator_forward.2} parent=0 // pred_fallthru
    _
  // Predicated region
  $region38: #{discriminator_forward.2} parent=0 // pred_check
    _
  $region39: #{discriminator_forward.2} parent=0 // pred_check_branch
    %1729 = sbr.rel (0) target = $region41
  $region40: #{discriminator_forward.2} parent=0 // pred_region
    %s1730 = sadd.s32 0, 0
    %s1731 = smul.u32 2, %s1730
    %p1732 = scmp.lt.s32.totalorder %s1731, 1
    %s1733 = scalar_select %p1732, %s1731, 1
    %s1734 = smul.addr %s1733, 3
    %s1735 = smul.addr %s1734, 4
    %s1736 = scalar_lea.vmem %s5, %s1735
  $region41: #{discriminator_forward.2} parent=0 // pred_fallthru
    _
  // Predicated region
  $region42: #{discriminator_forward.2} parent=0 // pred_check
    _
  $region43: #{discriminator_forward.2} parent=0 // pred_check_branch
    %1738 = sbr.rel (0) target = $region45
  $region44: #{discriminator_forward.2} parent=0 // pred_region
    _
  $region45: #{discriminator_forward.2} parent=0 // pred_fallthru
    _
  // Predicated region
  $region46: #{discriminator_forward.2} parent=0 // pred_check
    _
  $region47: #{discriminator_forward.2} parent=0 // pred_check_branch
    %1740 = sbr.rel (0) target = $region49
  $region48: #{discriminator_forward.2} parent=0 // pred_region
    _
  $region49: #{discriminator_forward.2} parent=0 // pred_fallthru
    _

</llo_original>
